<compile_context>
chip_gen: v7x
topology: tpu7x:2x2x1
jax: 0.10.0
libtpu: 0.0.40
codegen_flags: <defaults>
</compile_context>

<pallas_src>
import jax
import jax.numpy as jnp
from jax import lax
from jax.experimental import pallas as pl
from jax.experimental.pallas import tpu as pltpu


def _seq2seq_kernel(enc_x_ref, dec_x_ref, h0_ref,
                    e_wih_ref, e_whh_ref, e_b_ref,
                    d_wih_ref, d_whh_ref, d_b_ref,
                    w_out_ref, b_out_ref,
                    out_ref,
                    enc_xp_ref, dec_xp_ref, h_all_ref):
    """All refs are full-array VMEM blocks (tiny shapes, gridless call).

    enc_x_ref: (S_enc, B, H)   dec_x_ref: (S_dec, B, H)   h0_ref: (B, H)
    e_wih/e_whh/d_wih/d_whh: (H, H)   e_b/d_b: (1, H)
    w_out: (H, V_pad)   b_out: (1, V_pad)   out_ref: (S_dec, B, V_pad)
    enc_xp_ref: (S_enc, B, H) scratch   dec_xp_ref, h_all_ref: (S_dec, B, H)
    """
    s_enc, b, hd = enc_x_ref.shape
    s_dec = dec_x_ref.shape[0]
    v_pad = out_ref.shape[-1]

    # ---- Hoisted input projections (one big MXU matmul each, bias folded) ----
    enc_xp = (jnp.dot(enc_x_ref[...].reshape(s_enc * b, hd), e_wih_ref[...],
                      preferred_element_type=jnp.float32)
              + e_b_ref[...])
    enc_xp_ref[...] = enc_xp.reshape(s_enc, b, hd)

    dec_xp = (jnp.dot(dec_x_ref[...].reshape(s_dec * b, hd), d_wih_ref[...],
                      preferred_element_type=jnp.float32)
              + d_b_ref[...])
    dec_xp_ref[...] = dec_xp.reshape(s_dec, b, hd)

    # Hoist loop-invariant loads out of the recurrences.
    e_whh = e_whh_ref[...]
    d_whh = d_whh_ref[...]
    h0 = h0_ref[...]

    # ---- Encoder RNN: h_t = tanh(x_pre[t] + h_{t-1} @ W_hh) ----
    def enc_step(t, h):
        return jnp.tanh(enc_xp_ref[t]
                        + jnp.dot(h, e_whh,
                                  preferred_element_type=jnp.float32))

    h = lax.fori_loop(0, s_enc, enc_step, h0, unroll=True)

    # ---- Decoder RNN (output Linear deferred to after the loop) ----
    def dec_step(t, h):
        h_new = jnp.tanh(dec_xp_ref[t]
                         + jnp.dot(h, d_whh,
                                   preferred_element_type=jnp.float32))
        h_all_ref[t] = h_new
        return h_new

    lax.fori_loop(0, s_dec, dec_step, h, unroll=True)

    # ---- Deferred output Linear: one (S_dec*B, H) @ (H, V_pad) matmul and
    # a single bulk, lane-dense store.  (On v6e/v7x at real sizes this matmul
    # and the hoisted projections could be done in bf16 with f32 accumulation;
    # kept f32 here since the problem is tiny.)
    h_all = h_all_ref[...].reshape(s_dec * b, hd)
    logits = (jnp.dot(h_all, w_out_ref[...],
                      preferred_element_type=jnp.float32)
              + b_out_ref[...])
    out_ref[...] = logits.reshape(s_dec, b, v_pad)


def seq2seq_forward(params, enc_input, hidden, dec_input):
    """Mirrors Seq2Seq.forward(enc_input, hidden, dec_input) -> decoder_output.

    enc_input: (B, S_enc) int32 token ids (Chinese vocab)
    hidden:    (1, B, H)  float32 initial hidden state
    dec_input: (B, S_dec) int32 token ids (English vocab)
    returns:   (B, S_dec, voc_size_en) float32 logits
    """
    enc_emb = params["enc_emb"][enc_input]          # (B, S_enc, H)  glue gather
    dec_emb = params["dec_emb"][dec_input]          # (B, S_dec, H)
    b, s_enc, h_dim = enc_emb.shape
    s_dec = dec_emb.shape[1]
    v = params["w_out"].shape[1]

    # Pad batch to the 8-sublane tile and vocab to a 128-lane multiple so every
    # kernel operand / store is fully dense (padded rows/lanes are sliced off).
    b_pad = ((b + 7) // 8) * 8
    v_pad = ((v + 127) // 128) * 128

    enc_x = jnp.transpose(enc_emb, (1, 0, 2))       # (S_enc, B, H) time-major
    dec_x = jnp.transpose(dec_emb, (1, 0, 2))       # (S_dec, B, H)
    h0 = hidden[0]                                  # (B, H)

    db = b_pad - b
    if db:
        enc_x = jnp.pad(enc_x, ((0, 0), (0, db), (0, 0)))
        dec_x = jnp.pad(dec_x, ((0, 0), (0, db), (0, 0)))
        h0 = jnp.pad(h0, ((0, db), (0, 0)))

    w_out = params["w_out"]
    b_out = params["b_out"]
    dv = v_pad - v
    if dv:
        w_out = jnp.pad(w_out, ((0, 0), (0, dv)))
        b_out = jnp.pad(b_out, ((0, 0), (0, dv)))

    # Gridless call: everything fits comfortably in VMEM at these sizes.
    # TODO(synk): for v7x (2 TensorCores) at larger batch, add a batch grid
    # axis with dimension_semantics=("parallel",) to use both cores.
    out_tm = pl.pallas_call(
        _seq2seq_kernel,
        out_shape=jax.ShapeDtypeStruct((s_dec, b_pad, v_pad), jnp.float32),
        scratch_shapes=[
            pltpu.VMEM((s_enc, b_pad, h_dim), jnp.float32),   # hoisted enc x-proj
            pltpu.VMEM((s_dec, b_pad, h_dim), jnp.float32),   # hoisted dec x-proj
            pltpu.VMEM((s_dec, b_pad, h_dim), jnp.float32),   # decoder hidden slab
        ],
    )(enc_x, dec_x, h0,
      params["e_wih"], params["e_whh"], params["e_b"],
      params["d_wih"], params["d_whh"], params["d_b"],
      w_out, b_out)

    # Back to PyTorch batch-first layout and real vocab width.
    return jnp.transpose(out_tm, (1, 0, 2))[:b, :, :v]


def make_params(key, voc_size_cn, voc_size_en, n_hidden):
    """Deterministic synthetic parameters (shapes match the PyTorch module).

    nn.RNN stores W_ih/W_hh as (H, H) and computes x @ W^T; we store the
    transposed matrices so the kernel computes x @ W directly.  Same for the
    output nn.Linear: stored as (H, V) = weight.T.  Biases b_ih + b_hh are
    folded into a single (1, H) bias per RNN.
    """
    keys = jax.random.split(key, 11)
    scale = 1.0 / jnp.sqrt(n_hidden)
    u = lambda k, shape: jax.random.uniform(k, shape, jnp.float32, -scale, scale)
    return {
        "enc_emb": jax.random.normal(keys[0], (voc_size_cn, n_hidden), jnp.float32),
        "dec_emb": jax.random.normal(keys[1], (voc_size_en, n_hidden), jnp.float32),
        "e_wih": u(keys[2], (n_hidden, n_hidden)),
        "e_whh": u(keys[3], (n_hidden, n_hidden)),
        "e_b":   u(keys[4], (1, n_hidden)),
        "d_wih": u(keys[5], (n_hidden, n_hidden)),
        "d_whh": u(keys[6], (n_hidden, n_hidden)),
        "d_b":   u(keys[7], (1, n_hidden)),
        "w_out": u(keys[8], (n_hidden, voc_size_en)),
        "b_out": u(keys[9], (1, voc_size_en)),
    }


def _ref_forward(params, enc_input, hidden, dec_input):
    """Pure-JAX reference of the same forward pass (for validation)."""
    enc_emb = params["enc_emb"][enc_input]
    dec_emb = params["dec_emb"][dec_input]
    h = hidden[0]
    for t in range(enc_emb.shape[1]):
        h = jnp.tanh(enc_emb[:, t] @ params["e_wih"]
                     + h @ params["e_whh"] + params["e_b"])
    outs = []
    for t in range(dec_emb.shape[1]):
        h = jnp.tanh(dec_emb[:, t] @ params["d_wih"]
                     + h @ params["d_whh"] + params["d_b"])
        outs.append(h @ params["w_out"] + params["b_out"])
    return jnp.stack(outs, axis=1)


if __name__ == "__main__":
    # Small shapes consistent with the module (n_hidden = 128 as in the spec).
    B, S_ENC, S_DEC = 2, 8, 8
    N_HIDDEN = 128
    VOC_CN, VOC_EN = 12, 10

    key = jax.random.PRNGKey(0)
    k_par, k_enc, k_dec, k_h = jax.random.split(key, 4)

    params = make_params(k_par, VOC_CN, VOC_EN, N_HIDDEN)
    enc_input = jax.random.randint(k_enc, (B, S_ENC), 0, VOC_CN, jnp.int32)
    dec_input = jax.random.randint(k_dec, (B, S_DEC), 0, VOC_EN, jnp.int32)
    hidden = jax.random.normal(k_h, (1, B, N_HIDDEN), jnp.float32)

    out = seq2seq_forward(params, enc_input, hidden, dec_input)
    out = jax.block_until_ready(out)

    ref = _ref_forward(params, enc_input, hidden, dec_input)
    assert out.shape == (B, S_DEC, VOC_EN), out.shape
    assert jnp.allclose(out, ref, atol=1e-4, rtol=1e-4), "mismatch vs reference"

    print("KERNEL_OK")
</pallas_src>

<mosaic_0001>
module attributes {stable_mosaic.version = 11 : i64} {
  func.func @_seq2seq_kernel(%arg0: memref<8x8x128xf32, #tpu.memory_space<vmem>>, %arg1: memref<8x8x128xf32, #tpu.memory_space<vmem>>, %arg2: memref<8x128xf32, #tpu.memory_space<vmem>>, %arg3: memref<128x128xf32, #tpu.memory_space<vmem>>, %arg4: memref<128x128xf32, #tpu.memory_space<vmem>>, %arg5: memref<1x128xf32, #tpu.memory_space<vmem>>, %arg6: memref<128x128xf32, #tpu.memory_space<vmem>>, %arg7: memref<128x128xf32, #tpu.memory_space<vmem>>, %arg8: memref<1x128xf32, #tpu.memory_space<vmem>>, %arg9: memref<128x128xf32, #tpu.memory_space<vmem>>, %arg10: memref<1x128xf32, #tpu.memory_space<vmem>>, %arg11: memref<8x8x128xf32, #tpu.memory_space<vmem>>, %arg12: memref<8x8x128xf32, #tpu.memory_space<vmem>>, %arg13: memref<8x8x128xf32, #tpu.memory_space<vmem>>, %arg14: memref<8x8x128xf32, #tpu.memory_space<vmem>>) attributes {dimension_semantics = [], scalar_prefetch = 0 : i64, scratch_operands = 3 : i64, tpu.core_type = #tpu.core_type<tc>} {
    %c0 = arith.constant 0 : index
    %c0_0 = arith.constant 0 : index
    %c0_1 = arith.constant 0 : index
    %0 = vector.load %arg0[%c0, %c0_0, %c0_1] : memref<8x8x128xf32, #tpu.memory_space<vmem>>, vector<8x8x128xf32>
    %1 = vector.shape_cast %0 : vector<8x8x128xf32> to vector<64x128xf32>
    %c0_2 = arith.constant 0 : index
    %c0_3 = arith.constant 0 : index
    %2 = vector.load %arg3[%c0_2, %c0_3] : memref<128x128xf32, #tpu.memory_space<vmem>>, vector<128x128xf32>
    %cst = arith.constant dense<0.000000e+00> : vector<64x128xf32>
    %3 = tpu.matmul %1, %2, %cst {dimension_numbers = #tpu.dot_dimension_numbers<[1], [0], [0], [1], [0, 0, 1, 1], [], []>} : vector<64x128xf32>, vector<128x128xf32>, vector<64x128xf32> -> vector<64x128xf32>
    %c0_4 = arith.constant 0 : index
    %c0_5 = arith.constant 0 : index
    %4 = vector.load %arg5[%c0_4, %c0_5] : memref<1x128xf32, #tpu.memory_space<vmem>>, vector<1x128xf32>
    %5 = vector.broadcast %4 : vector<1x128xf32> to vector<64x128xf32>
    %6 = arith.addf %3, %5 : vector<64x128xf32>
    %7 = vector.shape_cast %6 : vector<64x128xf32> to vector<8x8x128xf32>
    %c0_6 = arith.constant 0 : index
    %c0_7 = arith.constant 0 : index
    %c0_8 = arith.constant 0 : index
    %8 = vector.load %arg12[%c0_6, %c0_7, %c0_8] : memref<8x8x128xf32, #tpu.memory_space<vmem>>, vector<8x8x128xf32>
    tpu.vector_store %arg12[%c0_6, %c0_7, %c0_8], %7 {strides = array<i32>} : memref<8x8x128xf32, #tpu.memory_space<vmem>>, vector<8x8x128xf32>,
    %c0_9 = arith.constant 0 : index
    %c0_10 = arith.constant 0 : index
    %c0_11 = arith.constant 0 : index
    %9 = vector.load %arg1[%c0_9, %c0_10, %c0_11] : memref<8x8x128xf32, #tpu.memory_space<vmem>>, vector<8x8x128xf32>
    %10 = vector.shape_cast %9 : vector<8x8x128xf32> to vector<64x128xf32>
    %c0_12 = arith.constant 0 : index
    %c0_13 = arith.constant 0 : index
    %11 = vector.load %arg6[%c0_12, %c0_13] : memref<128x128xf32, #tpu.memory_space<vmem>>, vector<128x128xf32>
    %cst_14 = arith.constant dense<0.000000e+00> : vector<64x128xf32>
    %12 = tpu.matmul %10, %11, %cst_14 {dimension_numbers = #tpu.dot_dimension_numbers<[1], [0], [0], [1], [0, 0, 1, 1], [], []>} : vector<64x128xf32>, vector<128x128xf32>, vector<64x128xf32> -> vector<64x128xf32>
    %c0_15 = arith.constant 0 : index
    %c0_16 = arith.constant 0 : index
    %13 = vector.load %arg8[%c0_15, %c0_16] : memref<1x128xf32, #tpu.memory_space<vmem>>, vector<1x128xf32>
    %14 = vector.broadcast %13 : vector<1x128xf32> to vector<64x128xf32>
    %15 = arith.addf %12, %14 : vector<64x128xf32>
    %16 = vector.shape_cast %15 : vector<64x128xf32> to vector<8x8x128xf32>
    %c0_17 = arith.constant 0 : index
    %c0_18 = arith.constant 0 : index
    %c0_19 = arith.constant 0 : index
    %17 = vector.load %arg13[%c0_17, %c0_18, %c0_19] : memref<8x8x128xf32, #tpu.memory_space<vmem>>, vector<8x8x128xf32>
    tpu.vector_store %arg13[%c0_17, %c0_18, %c0_19], %16 {strides = array<i32>} : memref<8x8x128xf32, #tpu.memory_space<vmem>>, vector<8x8x128xf32>,
    %c0_20 = arith.constant 0 : index
    %c0_21 = arith.constant 0 : index
    %18 = vector.load %arg4[%c0_20, %c0_21] : memref<128x128xf32, #tpu.memory_space<vmem>>, vector<128x128xf32>
    %c0_22 = arith.constant 0 : index
    %c0_23 = arith.constant 0 : index
    %19 = vector.load %arg7[%c0_22, %c0_23] : memref<128x128xf32, #tpu.memory_space<vmem>>, vector<128x128xf32>
    %c0_24 = arith.constant 0 : index
    %c0_25 = arith.constant 0 : index
    %20 = vector.load %arg2[%c0_24, %c0_25] : memref<8x128xf32, #tpu.memory_space<vmem>>, vector<8x128xf32>
    %c0_i32 = arith.constant 0 : i32
    %21 = arith.index_cast %c0_i32 : i32 to index
    %c0_26 = arith.constant 0 : index
    %c0_27 = arith.constant 0 : index
    %22 = vector.load %arg12[%21, %c0_26, %c0_27] : memref<8x8x128xf32, #tpu.memory_space<vmem>>, vector<1x8x128xf32>
    %23 = vector.shape_cast %22 : vector<1x8x128xf32> to vector<8x128xf32>
    %cst_28 = arith.constant dense<0.000000e+00> : vector<8x128xf32>
    %24 = tpu.matmul %20, %18, %cst_28 {dimension_numbers = #tpu.dot_dimension_numbers<[1], [0], [0], [1], [0, 0, 1, 1], [], []>} : vector<8x128xf32>, vector<128x128xf32>, vector<8x128xf32> -> vector<8x128xf32>
    %25 = arith.addf %23, %24 : vector<8x128xf32>
    %26 = math.tanh %25 : vector<8x128xf32>
    %c1_i32 = arith.constant 1 : i32
    %27 = arith.index_cast %c1_i32 : i32 to index
    %c0_29 = arith.constant 0 : index
    %c0_30 = arith.constant 0 : index
    %28 = vector.load %arg12[%27, %c0_29, %c0_30] : memref<8x8x128xf32, #tpu.memory_space<vmem>>, vector<1x8x128xf32>
    %29 = vector.shape_cast %28 : vector<1x8x128xf32> to vector<8x128xf32>
    %cst_31 = arith.constant dense<0.000000e+00> : vector<8x128xf32>
    %30 = tpu.matmul %26, %18, %cst_31 {dimension_numbers = #tpu.dot_dimension_numbers<[1], [0], [0], [1], [0, 0, 1, 1], [], []>} : vector<8x128xf32>, vector<128x128xf32>, vector<8x128xf32> -> vector<8x128xf32>
    %31 = arith.addf %29, %30 : vector<8x128xf32>
    %32 = math.tanh %31 : vector<8x128xf32>
    %c2_i32 = arith.constant 2 : i32
    %33 = arith.index_cast %c2_i32 : i32 to index
    %c0_32 = arith.constant 0 : index
    %c0_33 = arith.constant 0 : index
    %34 = vector.load %arg12[%33, %c0_32, %c0_33] : memref<8x8x128xf32, #tpu.memory_space<vmem>>, vector<1x8x128xf32>
    %35 = vector.shape_cast %34 : vector<1x8x128xf32> to vector<8x128xf32>
    %cst_34 = arith.constant dense<0.000000e+00> : vector<8x128xf32>
    %36 = tpu.matmul %32, %18, %cst_34 {dimension_numbers = #tpu.dot_dimension_numbers<[1], [0], [0], [1], [0, 0, 1, 1], [], []>} : vector<8x128xf32>, vector<128x128xf32>, vector<8x128xf32> -> vector<8x128xf32>
    %37 = arith.addf %35, %36 : vector<8x128xf32>
    %38 = math.tanh %37 : vector<8x128xf32>
    %c3_i32 = arith.constant 3 : i32
    %39 = arith.index_cast %c3_i32 : i32 to index
    %c0_35 = arith.constant 0 : index
    %c0_36 = arith.constant 0 : index
    %40 = vector.load %arg12[%39, %c0_35, %c0_36] : memref<8x8x128xf32, #tpu.memory_space<vmem>>, vector<1x8x128xf32>
    %41 = vector.shape_cast %40 : vector<1x8x128xf32> to vector<8x128xf32>
    %cst_37 = arith.constant dense<0.000000e+00> : vector<8x128xf32>
    %42 = tpu.matmul %38, %18, %cst_37 {dimension_numbers = #tpu.dot_dimension_numbers<[1], [0], [0], [1], [0, 0, 1, 1], [], []>} : vector<8x128xf32>, vector<128x128xf32>, vector<8x128xf32> -> vector<8x128xf32>
    %43 = arith.addf %41, %42 : vector<8x128xf32>
    %44 = math.tanh %43 : vector<8x128xf32>
    %c4_i32 = arith.constant 4 : i32
    %45 = arith.index_cast %c4_i32 : i32 to index
    %c0_38 = arith.constant 0 : index
    %c0_39 = arith.constant 0 : index
    %46 = vector.load %arg12[%45, %c0_38, %c0_39] : memref<8x8x128xf32, #tpu.memory_space<vmem>>, vector<1x8x128xf32>
    %47 = vector.shape_cast %46 : vector<1x8x128xf32> to vector<8x128xf32>
    %cst_40 = arith.constant dense<0.000000e+00> : vector<8x128xf32>
    %48 = tpu.matmul %44, %18, %cst_40 {dimension_numbers = #tpu.dot_dimension_numbers<[1], [0], [0], [1], [0, 0, 1, 1], [], []>} : vector<8x128xf32>, vector<128x128xf32>, vector<8x128xf32> -> vector<8x128xf32>
    %49 = arith.addf %47, %48 : vector<8x128xf32>
    %50 = math.tanh %49 : vector<8x128xf32>
    %c5_i32 = arith.constant 5 : i32
    %51 = arith.index_cast %c5_i32 : i32 to index
    %c0_41 = arith.constant 0 : index
    %c0_42 = arith.constant 0 : index
    %52 = vector.load %arg12[%51, %c0_41, %c0_42] : memref<8x8x128xf32, #tpu.memory_space<vmem>>, vector<1x8x128xf32>
    %53 = vector.shape_cast %52 : vector<1x8x128xf32> to vector<8x128xf32>
    %cst_43 = arith.constant dense<0.000000e+00> : vector<8x128xf32>
    %54 = tpu.matmul %50, %18, %cst_43 {dimension_numbers = #tpu.dot_dimension_numbers<[1], [0], [0], [1], [0, 0, 1, 1], [], []>} : vector<8x128xf32>, vector<128x128xf32>, vector<8x128xf32> -> vector<8x128xf32>
    %55 = arith.addf %53, %54 : vector<8x128xf32>
    %56 = math.tanh %55 : vector<8x128xf32>
    %c6_i32 = arith.constant 6 : i32
    %57 = arith.index_cast %c6_i32 : i32 to index
    %c0_44 = arith.constant 0 : index
    %c0_45 = arith.constant 0 : index
    %58 = vector.load %arg12[%57, %c0_44, %c0_45] : memref<8x8x128xf32, #tpu.memory_space<vmem>>, vector<1x8x128xf32>
    %59 = vector.shape_cast %58 : vector<1x8x128xf32> to vector<8x128xf32>
    %cst_46 = arith.constant dense<0.000000e+00> : vector<8x128xf32>
    %60 = tpu.matmul %56, %18, %cst_46 {dimension_numbers = #tpu.dot_dimension_numbers<[1], [0], [0], [1], [0, 0, 1, 1], [], []>} : vector<8x128xf32>, vector<128x128xf32>, vector<8x128xf32> -> vector<8x128xf32>
    %61 = arith.addf %59, %60 : vector<8x128xf32>
    %62 = math.tanh %61 : vector<8x128xf32>
    %c7_i32 = arith.constant 7 : i32
    %63 = arith.index_cast %c7_i32 : i32 to index
    %c0_47 = arith.constant 0 : index
    %c0_48 = arith.constant 0 : index
    %64 = vector.load %arg12[%63, %c0_47, %c0_48] : memref<8x8x128xf32, #tpu.memory_space<vmem>>, vector<1x8x128xf32>
    %65 = vector.shape_cast %64 : vector<1x8x128xf32> to vector<8x128xf32>
    %cst_49 = arith.constant dense<0.000000e+00> : vector<8x128xf32>
    %66 = tpu.matmul %62, %18, %cst_49 {dimension_numbers = #tpu.dot_dimension_numbers<[1], [0], [0], [1], [0, 0, 1, 1], [], []>} : vector<8x128xf32>, vector<128x128xf32>, vector<8x128xf32> -> vector<8x128xf32>
    %67 = arith.addf %65, %66 : vector<8x128xf32>
    %68 = math.tanh %67 : vector<8x128xf32>
    %c8_i32 = arith.constant 8 : i32
    %c0_i32_50 = arith.constant 0 : i32
    %69 = arith.index_cast %c0_i32_50 : i32 to index
    %c0_51 = arith.constant 0 : index
    %c0_52 = arith.constant 0 : index
    %70 = vector.load %arg13[%69, %c0_51, %c0_52] : memref<8x8x128xf32, #tpu.memory_space<vmem>>, vector<1x8x128xf32>
    %71 = vector.shape_cast %70 : vector<1x8x128xf32> to vector<8x128xf32>
    %cst_53 = arith.constant dense<0.000000e+00> : vector<8x128xf32>
    %72 = tpu.matmul %68, %19, %cst_53 {dimension_numbers = #tpu.dot_dimension_numbers<[1], [0], [0], [1], [0, 0, 1, 1], [], []>} : vector<8x128xf32>, vector<128x128xf32>, vector<8x128xf32> -> vector<8x128xf32>
    %73 = arith.addf %71, %72 : vector<8x128xf32>
    %74 = math.tanh %73 : vector<8x128xf32>
    %75 = arith.index_cast %c0_i32_50 : i32 to index
    %c0_54 = arith.constant 0 : index
    %c0_55 = arith.constant 0 : index
    %76 = vector.load %arg14[%75, %c0_54, %c0_55] : memref<8x8x128xf32, #tpu.memory_space<vmem>>, vector<1x8x128xf32>
    %77 = vector.shape_cast %76 : vector<1x8x128xf32> to vector<8x128xf32>
    %78 = vector.shape_cast %74 : vector<8x128xf32> to vector<1x8x128xf32>
    tpu.vector_store %arg14[%75, %c0_54, %c0_55], %78 {strides = array<i32>} : memref<8x8x128xf32, #tpu.memory_space<vmem>>, vector<1x8x128xf32>,
    %c1_i32_56 = arith.constant 1 : i32
    %79 = arith.index_cast %c1_i32_56 : i32 to index
    %c0_57 = arith.constant 0 : index
    %c0_58 = arith.constant 0 : index
    %80 = vector.load %arg13[%79, %c0_57, %c0_58] : memref<8x8x128xf32, #tpu.memory_space<vmem>>, vector<1x8x128xf32>
    %81 = vector.shape_cast %80 : vector<1x8x128xf32> to vector<8x128xf32>
    %cst_59 = arith.constant dense<0.000000e+00> : vector<8x128xf32>
    %82 = tpu.matmul %74, %19, %cst_59 {dimension_numbers = #tpu.dot_dimension_numbers<[1], [0], [0], [1], [0, 0, 1, 1], [], []>} : vector<8x128xf32>, vector<128x128xf32>, vector<8x128xf32> -> vector<8x128xf32>
    %83 = arith.addf %81, %82 : vector<8x128xf32>
    %84 = math.tanh %83 : vector<8x128xf32>
    %85 = arith.index_cast %c1_i32_56 : i32 to index
    %c0_60 = arith.constant 0 : index
    %c0_61 = arith.constant 0 : index
    %86 = vector.load %arg14[%85, %c0_60, %c0_61] : memref<8x8x128xf32, #tpu.memory_space<vmem>>, vector<1x8x128xf32>
    %87 = vector.shape_cast %86 : vector<1x8x128xf32> to vector<8x128xf32>
    %88 = vector.shape_cast %84 : vector<8x128xf32> to vector<1x8x128xf32>
    tpu.vector_store %arg14[%85, %c0_60, %c0_61], %88 {strides = array<i32>} : memref<8x8x128xf32, #tpu.memory_space<vmem>>, vector<1x8x128xf32>,
    %c2_i32_62 = arith.constant 2 : i32
    %89 = arith.index_cast %c2_i32_62 : i32 to index
    %c0_63 = arith.constant 0 : index
    %c0_64 = arith.constant 0 : index
    %90 = vector.load %arg13[%89, %c0_63, %c0_64] : memref<8x8x128xf32, #tpu.memory_space<vmem>>, vector<1x8x128xf32>
    %91 = vector.shape_cast %90 : vector<1x8x128xf32> to vector<8x128xf32>
    %cst_65 = arith.constant dense<0.000000e+00> : vector<8x128xf32>
    %92 = tpu.matmul %84, %19, %cst_65 {dimension_numbers = #tpu.dot_dimension_numbers<[1], [0], [0], [1], [0, 0, 1, 1], [], []>} : vector<8x128xf32>, vector<128x128xf32>, vector<8x128xf32> -> vector<8x128xf32>
    %93 = arith.addf %91, %92 : vector<8x128xf32>
    %94 = math.tanh %93 : vector<8x128xf32>
    %95 = arith.index_cast %c2_i32_62 : i32 to index
    %c0_66 = arith.constant 0 : index
    %c0_67 = arith.constant 0 : index
    %96 = vector.load %arg14[%95, %c0_66, %c0_67] : memref<8x8x128xf32, #tpu.memory_space<vmem>>, vector<1x8x128xf32>
    %97 = vector.shape_cast %96 : vector<1x8x128xf32> to vector<8x128xf32>
    %98 = vector.shape_cast %94 : vector<8x128xf32> to vector<1x8x128xf32>
    tpu.vector_store %arg14[%95, %c0_66, %c0_67], %98 {strides = array<i32>} : memref<8x8x128xf32, #tpu.memory_space<vmem>>, vector<1x8x128xf32>,
    %c3_i32_68 = arith.constant 3 : i32
    %99 = arith.index_cast %c3_i32_68 : i32 to index
    %c0_69 = arith.constant 0 : index
    %c0_70 = arith.constant 0 : index
    %100 = vector.load %arg13[%99, %c0_69, %c0_70] : memref<8x8x128xf32, #tpu.memory_space<vmem>>, vector<1x8x128xf32>
    %101 = vector.shape_cast %100 : vector<1x8x128xf32> to vector<8x128xf32>
    %cst_71 = arith.constant dense<0.000000e+00> : vector<8x128xf32>
    %102 = tpu.matmul %94, %19, %cst_71 {dimension_numbers = #tpu.dot_dimension_numbers<[1], [0], [0], [1], [0, 0, 1, 1], [], []>} : vector<8x128xf32>, vector<128x128xf32>, vector<8x128xf32> -> vector<8x128xf32>
    %103 = arith.addf %101, %102 : vector<8x128xf32>
    %104 = math.tanh %103 : vector<8x128xf32>
    %105 = arith.index_cast %c3_i32_68 : i32 to index
    %c0_72 = arith.constant 0 : index
    %c0_73 = arith.constant 0 : index
    %106 = vector.load %arg14[%105, %c0_72, %c0_73] : memref<8x8x128xf32, #tpu.memory_space<vmem>>, vector<1x8x128xf32>
    %107 = vector.shape_cast %106 : vector<1x8x128xf32> to vector<8x128xf32>
    %108 = vector.shape_cast %104 : vector<8x128xf32> to vector<1x8x128xf32>
    tpu.vector_store %arg14[%105, %c0_72, %c0_73], %108 {strides = array<i32>} : memref<8x8x128xf32, #tpu.memory_space<vmem>>, vector<1x8x128xf32>,
    %c4_i32_74 = arith.constant 4 : i32
    %109 = arith.index_cast %c4_i32_74 : i32 to index
    %c0_75 = arith.constant 0 : index
    %c0_76 = arith.constant 0 : index
    %110 = vector.load %arg13[%109, %c0_75, %c0_76] : memref<8x8x128xf32, #tpu.memory_space<vmem>>, vector<1x8x128xf32>
    %111 = vector.shape_cast %110 : vector<1x8x128xf32> to vector<8x128xf32>
    %cst_77 = arith.constant dense<0.000000e+00> : vector<8x128xf32>
    %112 = tpu.matmul %104, %19, %cst_77 {dimension_numbers = #tpu.dot_dimension_numbers<[1], [0], [0], [1], [0, 0, 1, 1], [], []>} : vector<8x128xf32>, vector<128x128xf32>, vector<8x128xf32> -> vector<8x128xf32>
    %113 = arith.addf %111, %112 : vector<8x128xf32>
    %114 = math.tanh %113 : vector<8x128xf32>
    %115 = arith.index_cast %c4_i32_74 : i32 to index
    %c0_78 = arith.constant 0 : index
    %c0_79 = arith.constant 0 : index
    %116 = vector.load %arg14[%115, %c0_78, %c0_79] : memref<8x8x128xf32, #tpu.memory_space<vmem>>, vector<1x8x128xf32>
    %117 = vector.shape_cast %116 : vector<1x8x128xf32> to vector<8x128xf32>
    %118 = vector.shape_cast %114 : vector<8x128xf32> to vector<1x8x128xf32>
    tpu.vector_store %arg14[%115, %c0_78, %c0_79], %118 {strides = array<i32>} : memref<8x8x128xf32, #tpu.memory_space<vmem>>, vector<1x8x128xf32>,
    %c5_i32_80 = arith.constant 5 : i32
    %119 = arith.index_cast %c5_i32_80 : i32 to index
    %c0_81 = arith.constant 0 : index
    %c0_82 = arith.constant 0 : index
    %120 = vector.load %arg13[%119, %c0_81, %c0_82] : memref<8x8x128xf32, #tpu.memory_space<vmem>>, vector<1x8x128xf32>
    %121 = vector.shape_cast %120 : vector<1x8x128xf32> to vector<8x128xf32>
    %cst_83 = arith.constant dense<0.000000e+00> : vector<8x128xf32>
    %122 = tpu.matmul %114, %19, %cst_83 {dimension_numbers = #tpu.dot_dimension_numbers<[1], [0], [0], [1], [0, 0, 1, 1], [], []>} : vector<8x128xf32>, vector<128x128xf32>, vector<8x128xf32> -> vector<8x128xf32>
    %123 = arith.addf %121, %122 : vector<8x128xf32>
    %124 = math.tanh %123 : vector<8x128xf32>
    %125 = arith.index_cast %c5_i32_80 : i32 to index
    %c0_84 = arith.constant 0 : index
    %c0_85 = arith.constant 0 : index
    %126 = vector.load %arg14[%125, %c0_84, %c0_85] : memref<8x8x128xf32, #tpu.memory_space<vmem>>, vector<1x8x128xf32>
    %127 = vector.shape_cast %126 : vector<1x8x128xf32> to vector<8x128xf32>
    %128 = vector.shape_cast %124 : vector<8x128xf32> to vector<1x8x128xf32>
    tpu.vector_store %arg14[%125, %c0_84, %c0_85], %128 {strides = array<i32>} : memref<8x8x128xf32, #tpu.memory_space<vmem>>, vector<1x8x128xf32>,
    %c6_i32_86 = arith.constant 6 : i32
    %129 = arith.index_cast %c6_i32_86 : i32 to index
    %c0_87 = arith.constant 0 : index
    %c0_88 = arith.constant 0 : index
    %130 = vector.load %arg13[%129, %c0_87, %c0_88] : memref<8x8x128xf32, #tpu.memory_space<vmem>>, vector<1x8x128xf32>
    %131 = vector.shape_cast %130 : vector<1x8x128xf32> to vector<8x128xf32>
    %cst_89 = arith.constant dense<0.000000e+00> : vector<8x128xf32>
    %132 = tpu.matmul %124, %19, %cst_89 {dimension_numbers = #tpu.dot_dimension_numbers<[1], [0], [0], [1], [0, 0, 1, 1], [], []>} : vector<8x128xf32>, vector<128x128xf32>, vector<8x128xf32> -> vector<8x128xf32>
    %133 = arith.addf %131, %132 : vector<8x128xf32>
    %134 = math.tanh %133 : vector<8x128xf32>
    %135 = arith.index_cast %c6_i32_86 : i32 to index
    %c0_90 = arith.constant 0 : index
    %c0_91 = arith.constant 0 : index
    %136 = vector.load %arg14[%135, %c0_90, %c0_91] : memref<8x8x128xf32, #tpu.memory_space<vmem>>, vector<1x8x128xf32>
    %137 = vector.shape_cast %136 : vector<1x8x128xf32> to vector<8x128xf32>
    %138 = vector.shape_cast %134 : vector<8x128xf32> to vector<1x8x128xf32>
    tpu.vector_store %arg14[%135, %c0_90, %c0_91], %138 {strides = array<i32>} : memref<8x8x128xf32, #tpu.memory_space<vmem>>, vector<1x8x128xf32>,
    %c7_i32_92 = arith.constant 7 : i32
    %139 = arith.index_cast %c7_i32_92 : i32 to index
    %c0_93 = arith.constant 0 : index
    %c0_94 = arith.constant 0 : index
    %140 = vector.load %arg13[%139, %c0_93, %c0_94] : memref<8x8x128xf32, #tpu.memory_space<vmem>>, vector<1x8x128xf32>
    %141 = vector.shape_cast %140 : vector<1x8x128xf32> to vector<8x128xf32>
    %cst_95 = arith.constant dense<0.000000e+00> : vector<8x128xf32>
    %142 = tpu.matmul %134, %19, %cst_95 {dimension_numbers = #tpu.dot_dimension_numbers<[1], [0], [0], [1], [0, 0, 1, 1], [], []>} : vector<8x128xf32>, vector<128x128xf32>, vector<8x128xf32> -> vector<8x128xf32>
    %143 = arith.addf %141, %142 : vector<8x128xf32>
    %144 = math.tanh %143 : vector<8x128xf32>
    %145 = arith.index_cast %c7_i32_92 : i32 to index
    %c0_96 = arith.constant 0 : index
    %c0_97 = arith.constant 0 : index
    %146 = vector.load %arg14[%145, %c0_96, %c0_97] : memref<8x8x128xf32, #tpu.memory_space<vmem>>, vector<1x8x128xf32>
    %147 = vector.shape_cast %146 : vector<1x8x128xf32> to vector<8x128xf32>
    %148 = vector.shape_cast %144 : vector<8x128xf32> to vector<1x8x128xf32>
    tpu.vector_store %arg14[%145, %c0_96, %c0_97], %148 {strides = array<i32>} : memref<8x8x128xf32, #tpu.memory_space<vmem>>, vector<1x8x128xf32>,
    %c8_i32_98 = arith.constant 8 : i32
    %c0_99 = arith.constant 0 : index
    %c0_100 = arith.constant 0 : index
    %c0_101 = arith.constant 0 : index
    %149 = vector.load %arg14[%c0_99, %c0_100, %c0_101] : memref<8x8x128xf32, #tpu.memory_space<vmem>>, vector<8x8x128xf32>
    %150 = vector.shape_cast %149 : vector<8x8x128xf32> to vector<64x128xf32>
    %c0_102 = arith.constant 0 : index
    %c0_103 = arith.constant 0 : index
    %151 = vector.load %arg9[%c0_102, %c0_103] : memref<128x128xf32, #tpu.memory_space<vmem>>, vector<128x128xf32>
    %cst_104 = arith.constant dense<0.000000e+00> : vector<64x128xf32>
    %152 = tpu.matmul %150, %151, %cst_104 {dimension_numbers = #tpu.dot_dimension_numbers<[1], [0], [0], [1], [0, 0, 1, 1], [], []>} : vector<64x128xf32>, vector<128x128xf32>, vector<64x128xf32> -> vector<64x128xf32>
    %c0_105 = arith.constant 0 : index
    %c0_106 = arith.constant 0 : index
    %153 = vector.load %arg10[%c0_105, %c0_106] : memref<1x128xf32, #tpu.memory_space<vmem>>, vector<1x128xf32>
    %154 = vector.broadcast %153 : vector<1x128xf32> to vector<64x128xf32>
    %155 = arith.addf %152, %154 : vector<64x128xf32>
    %156 = vector.shape_cast %155 : vector<64x128xf32> to vector<8x8x128xf32>
    %c0_107 = arith.constant 0 : index
    %c0_108 = arith.constant 0 : index
    %c0_109 = arith.constant 0 : index
    %157 = vector.load %arg11[%c0_107, %c0_108, %c0_109] : memref<8x8x128xf32, #tpu.memory_space<vmem>>, vector<8x8x128xf32>
    tpu.vector_store %arg11[%c0_107, %c0_108, %c0_109], %156 {strides = array<i32>} : memref<8x8x128xf32, #tpu.memory_space<vmem>>, vector<8x8x128xf32>,
    return
  }
}

</mosaic_0001>

<llo_original>
// kernel: tpu_custom_call.1
$region0: #{tpu_custom_call.1}
  #allocation0 [shape = 'u32[]', space=smem, size = 0x4, offset = 0x4, fixed_abs, tag = 'smem constant byte address 0x4 - core index']
  #allocation1 [shape = 'u32[144,128]{1,0:T(1,128)}', space=vmem, size = 0x12000, scoped, tag = 'internal scratch']
  #allocation2 [shape = 'f32[8,8,128]{2,1,0:T(8,128)}', space=vmem, size = 0x8000, scoped, tag = 'scratch operand']
  #allocation3 [shape = 'f32[8,8,128]{2,1,0:T(8,128)}', space=vmem, size = 0x8000, scoped, tag = 'scratch operand']
  #allocation4 [shape = 'f32[8,8,128]{2,1,0:T(8,128)}', space=vmem, size = 0x8000, scoped, tag = 'scratch operand']
  %s0 = inlined_call_operand.hbm [shape: f32[8,8,128], index: 0, kind: input, shape index: {}]
  %s1 = inlined_call_operand.hbm [shape: f32[8,8,128], index: 1, kind: input, shape index: {}]
  %s2 = inlined_call_operand.hbm [shape: f32[8,128], index: 2, kind: input, shape index: {}]
  %s3 = inlined_call_operand.hbm [shape: f32[128,128], index: 3, kind: input, shape index: {}]
  %s4 = inlined_call_operand.hbm [shape: f32[128,128], index: 4, kind: input, shape index: {}]
  %s5 = inlined_call_operand.vmem [shape: f32[1,128], index: 5, kind: input, shape index: {}]
  %s6 = inlined_call_operand.hbm [shape: f32[128,128], index: 6, kind: input, shape index: {}]
  %s7 = inlined_call_operand.hbm [shape: f32[128,128], index: 7, kind: input, shape index: {}]
  %s8 = inlined_call_operand.vmem [shape: f32[1,128], index: 8, kind: input, shape index: {}]
  %s9 = inlined_call_operand.hbm [shape: f32[128,128], index: 9, kind: input, shape index: {}]
  %s10 = inlined_call_operand.vmem [shape: f32[1,128], index: 10, kind: input, shape index: {}]
  %s11 = inlined_call_operand.hbm [shape: f32[8,8,128], index: 11, kind: output, shape index: {}]
  %s12 = sld [smem:[#allocation0]]
  $region86: #{tpu_custom_call.1} parent=0
    _
  %s14 = ssub.s32 1, %s12
  %s15 = scalar_select 0, %s14, %s12
  $region1: #{tpu_custom_call.1} parent=0
    #allocation5 [shape = 'u8[32768]{0}', space=vmem, size = 0x8000, scoped, tag = 'input window, operand 0, single buffered']
    #allocation6 [shape = 's32[1]{0}', space=sflag, size = 0x4, scoped, tag = 'scoped memory for tpu_custom_call.1']
    #allocation7 [shape = 's32[1]{0}', space=sflag, size = 0x4, scoped, tag = 'scoped memory for tpu_custom_call.1']
    #allocation8 [shape = 'u8[32768]{0}', space=vmem, size = 0x8000, scoped, tag = 'input window, operand 1, single buffered']
    #allocation9 [shape = 's32[1]{0}', space=sflag, size = 0x4, scoped, tag = 'scoped memory for tpu_custom_call.1']
    #allocation10 [shape = 'u8[4096]{0}', space=vmem, size = 0x1000, scoped, tag = 'input window, operand 2, single buffered']
    #allocation11 [shape = 'u8[65536]{0}', space=vmem, size = 0x10000, scoped, tag = 'input window, operand 3, single buffered']
    #allocation12 [shape = 's32[1]{0}', space=sflag, size = 0x4, scoped, tag = 'scoped memory for tpu_custom_call.1']
    #allocation13 [shape = 'u8[65536]{0}', space=vmem, size = 0x10000, scoped, tag = 'input window, operand 4, single buffered']
    #allocation14 [shape = 'u8[65536]{0}', space=vmem, size = 0x10000, scoped, tag = 'input window, operand 6, single buffered']
    #allocation15 [shape = 's32[1]{0}', space=sflag, size = 0x4, scoped, tag = 'scoped memory for tpu_custom_call.1']
    #allocation16 [shape = 'u8[65536]{0}', space=vmem, size = 0x10000, scoped, tag = 'input window, operand 7, single buffered']
    #allocation17 [shape = 'u8[65536]{0}', space=vmem, size = 0x10000, scoped, tag = 'input window, operand 9, single buffered']
    #allocation18 [shape = 's32[1]{0}', space=sflag, size = 0x4, scoped, tag = 'scoped memory for tpu_custom_call.1']
    #allocation19 [shape = 'u8[32768]{0}', space=vmem, size = 0x8000, scoped, tag = 'output window, operand 0, single buffered']
    %16 = vsyncpa [#allocation6], 0
    %17 = vsyncpa [#allocation9], 0
    %18 = vsyncpa [#allocation12], 0
    %19 = vsyncpa [#allocation15], 0
    %20 = vsyncpa [#allocation18], 0
    %21 = vsyncpa [#allocation7], 0
    // Predicated region
    $region2: #{tpu_custom_call.1} parent=1 // pred_check
      _
    $region3: #{tpu_custom_call.1} parent=1 // pred_check_branch
      %23 = sbr.rel (0) target = $region5
    $region4: #{tpu_custom_call.1} parent=1 // pred_region
      %s25 = ssub.s32 1024, 1024
      %26 = vsyncadd [#allocation6], %s25
      %s27 = sshll.u32 [#allocation5], 4
      %s28 = int_to_ptr.vmem [resolvable:$true] %s27
      %33 = dma.hbm_to_vmem [thread:$0]  %s0, 1024, %s28, [#allocation6], 128, 128, 8
    $region5: #{tpu_custom_call.1} parent=1 // pred_fallthru
      _
    // Predicated region
    $region6: #{tpu_custom_call.1} parent=1 // pred_check
      _
    $region7: #{tpu_custom_call.1} parent=1 // pred_check_branch
      %35 = sbr.rel (0) target = $region9
    $region8: #{tpu_custom_call.1} parent=1 // pred_region
      %s37 = ssub.s32 1024, 1024
      %38 = vsyncadd [#allocation9], %s37
      %s39 = sshll.u32 [#allocation8], 4
      %s40 = int_to_ptr.vmem [resolvable:$true] %s39
      %45 = dma.hbm_to_vmem [thread:$0]  %s1, 1024, %s40, [#allocation9], 128, 128, 8
    $region9: #{tpu_custom_call.1} parent=1 // pred_fallthru
      _
    // Predicated region
    $region10: #{tpu_custom_call.1} parent=1 // pred_check
      _
    $region11: #{tpu_custom_call.1} parent=1 // pred_check_branch
      %47 = sbr.rel (0) target = $region13
    $region12: #{tpu_custom_call.1} parent=1 // pred_region
      %s49 = ssub.s32 128, 128
      %50 = vsyncadd [#allocation9], %s49
      %s52 = sshll.u32 [#allocation10], 4
      %s53 = int_to_ptr.vmem [resolvable:$true] %s52
      %55 = dma.hbm_to_vmem [thread:$0]  %s2, 128, %s53, [#allocation9]
    $region13: #{tpu_custom_call.1} parent=1 // pred_fallthru
      _
    // Predicated region
    $region14: #{tpu_custom_call.1} parent=1 // pred_check
      _
    $region15: #{tpu_custom_call.1} parent=1 // pred_check_branch
      %57 = sbr.rel (0) target = $region17
    $region16: #{tpu_custom_call.1} parent=1 // pred_region
      %s59 = ssub.s32 2048, 2048
      %60 = vsyncadd [#allocation12], %s59
      %s61 = sshll.u32 [#allocation11], 4
      %s62 = int_to_ptr.vmem [resolvable:$true] %s61
      %67 = dma.hbm_to_vmem [thread:$0]  %s3, 2048, %s62, [#allocation12], 128, 128, 8
    $region17: #{tpu_custom_call.1} parent=1 // pred_fallthru
      _
    // Predicated region
    $region18: #{tpu_custom_call.1} parent=1 // pred_check
      _
    $region19: #{tpu_custom_call.1} parent=1 // pred_check_branch
      %69 = sbr.rel (0) target = $region21
    $region20: #{tpu_custom_call.1} parent=1 // pred_region
      %s71 = ssub.s32 2048, 2048
      %72 = vsyncadd [#allocation12], %s71
      %s73 = sshll.u32 [#allocation13], 4
      %s74 = int_to_ptr.vmem [resolvable:$true] %s73
      %79 = dma.hbm_to_vmem [thread:$0]  %s4, 2048, %s74, [#allocation12], 128, 128, 8
    $region21: #{tpu_custom_call.1} parent=1 // pred_fallthru
      _
    // Predicated region
    $region22: #{tpu_custom_call.1} parent=1 // pred_check
      _
    $region23: #{tpu_custom_call.1} parent=1 // pred_check_branch
      %81 = sbr.rel (0) target = $region25
    $region24: #{tpu_custom_call.1} parent=1 // pred_region
      _
    $region25: #{tpu_custom_call.1} parent=1 // pred_fallthru
      _
    // Predicated region
    $region26: #{tpu_custom_call.1} parent=1 // pred_check
      _
    $region27: #{tpu_custom_call.1} parent=1 // pred_check_branch
      %83 = sbr.rel (0) target = $region29
    $region28: #{tpu_custom_call.1} parent=1 // pred_region
      %s85 = ssub.s32 2048, 2048
      %86 = vsyncadd [#allocation15], %s85
      %s87 = sshll.u32 [#allocation14], 4
      %s88 = int_to_ptr.vmem [resolvable:$true] %s87
      %93 = dma.hbm_to_vmem [thread:$0]  %s6, 2048, %s88, [#allocation15], 128, 128, 8
    $region29: #{tpu_custom_call.1} parent=1 // pred_fallthru
      _
    // Predicated region
    $region30: #{tpu_custom_call.1} parent=1 // pred_check
      _
    $region31: #{tpu_custom_call.1} parent=1 // pred_check_branch
      %95 = sbr.rel (0) target = $region33
    $region32: #{tpu_custom_call.1} parent=1 // pred_region
      %s97 = ssub.s32 2048, 2048
      %98 = vsyncadd [#allocation15], %s97
      %s99 = sshll.u32 [#allocation16], 4
      %s100 = int_to_ptr.vmem [resolvable:$true] %s99
      %105 = dma.hbm_to_vmem [thread:$0]  %s7, 2048, %s100, [#allocation15], 128, 128, 8
    $region33: #{tpu_custom_call.1} parent=1 // pred_fallthru
      _
    // Predicated region
    $region34: #{tpu_custom_call.1} parent=1 // pred_check
      _
    $region35: #{tpu_custom_call.1} parent=1 // pred_check_branch
      %107 = sbr.rel (0) target = $region37
    $region36: #{tpu_custom_call.1} parent=1 // pred_region
      _
    $region37: #{tpu_custom_call.1} parent=1 // pred_fallthru
      _
    // Predicated region
    $region38: #{tpu_custom_call.1} parent=1 // pred_check
      _
    $region39: #{tpu_custom_call.1} parent=1 // pred_check_branch
      %109 = sbr.rel (0) target = $region41
    $region40: #{tpu_custom_call.1} parent=1 // pred_region
      %s111 = ssub.s32 2048, 2048
      %112 = vsyncadd [#allocation18], %s111
      %s113 = sshll.u32 [#allocation17], 4
      %s114 = int_to_ptr.vmem [resolvable:$true] %s113
      %119 = dma.hbm_to_vmem [thread:$0]  %s9, 2048, %s114, [#allocation18], 128, 128, 8
    $region41: #{tpu_custom_call.1} parent=1 // pred_fallthru
      _
    // Predicated region
    $region42: #{tpu_custom_call.1} parent=1 // pred_check
      _
    $region43: #{tpu_custom_call.1} parent=1 // pred_check_branch
      %121 = sbr.rel (0) target = $region45
    $region44: #{tpu_custom_call.1} parent=1 // pred_region
      _
    $region45: #{tpu_custom_call.1} parent=1 // pred_fallthru
      _
    // Predicated region
    $region46: #{tpu_custom_call.1} parent=1 // pred_check
      _
    $region47: #{tpu_custom_call.1} parent=1 // pred_check_branch
      %123 = sbr.rel (0) target = $region49
    $region48: #{tpu_custom_call.1} parent=1 // pred_region
      %124 = dma.done [#allocation6], 1024
    $region49: #{tpu_custom_call.1} parent=1 // pred_fallthru
      _
    // Predicated region
    $region50: #{tpu_custom_call.1} parent=1 // pred_check
      _
    $region51: #{tpu_custom_call.1} parent=1 // pred_check_branch
      %126 = sbr.rel (0) target = $region53
    $region52: #{tpu_custom_call.1} parent=1 // pred_region
      %127 = dma.done [#allocation9], 1024
    $region53: #{tpu_custom_call.1} parent=1 // pred_fallthru
      _
    // Predicated region
    $region54: #{tpu_custom_call.1} parent=1 // pred_check
      _
    $region55: #{tpu_custom_call.1} parent=1 // pred_check_branch
      %129 = sbr.rel (0) target = $region57
    $region56: #{tpu_custom_call.1} parent=1 // pred_region
      %130 = dma.done [#allocation9], 128
    $region57: #{tpu_custom_call.1} parent=1 // pred_fallthru
      _
    // Predicated region
    $region58: #{tpu_custom_call.1} parent=1 // pred_check
      _
    $region59: #{tpu_custom_call.1} parent=1 // pred_check_branch
      %132 = sbr.rel (0) target = $region61
    $region60: #{tpu_custom_call.1} parent=1 // pred_region
      %133 = dma.done [#allocation12], 2048
    $region61: #{tpu_custom_call.1} parent=1 // pred_fallthru
      _
    // Predicated region
    $region62: #{tpu_custom_call.1} parent=1 // pred_check
      _
    $region63: #{tpu_custom_call.1} parent=1 // pred_check_branch
      %135 = sbr.rel (0) target = $region65
    $region64: #{tpu_custom_call.1} parent=1 // pred_region
      %136 = dma.done [#allocation12], 2048
    $region65: #{tpu_custom_call.1} parent=1 // pred_fallthru
      _
    // Predicated region
    $region66: #{tpu_custom_call.1} parent=1 // pred_check
      _
    $region67: #{tpu_custom_call.1} parent=1 // pred_check_branch
      %138 = sbr.rel (0) target = $region69
    $region68: #{tpu_custom_call.1} parent=1 // pred_region
      %139 = dma.done [#allocation15], 2048
    $region69: #{tpu_custom_call.1} parent=1 // pred_fallthru
      _
    // Predicated region
    $region70: #{tpu_custom_call.1} parent=1 // pred_check
      _
    $region71: #{tpu_custom_call.1} parent=1 // pred_check_branch
      %141 = sbr.rel (0) target = $region73
    $region72: #{tpu_custom_call.1} parent=1 // pred_region
      %142 = dma.done [#allocation15], 2048
    $region73: #{tpu_custom_call.1} parent=1 // pred_fallthru
      _
    // Predicated region
    $region74: #{tpu_custom_call.1} parent=1 // pred_check
      _
    $region75: #{tpu_custom_call.1} parent=1 // pred_check_branch
      %144 = sbr.rel (0) target = $region77
    $region76: #{tpu_custom_call.1} parent=1 // pred_region
      %145 = dma.done [#allocation18], 2048
    $region77: #{tpu_custom_call.1} parent=1 // pred_fallthru
      _
    %v146 = vld [vmem:[#allocation5] sm:$0xff]
    %v147 = vld [vmem:[#allocation5 + $0x8] sm:$0xff]
    %v148 = vld [vmem:[#allocation5 + $0x10] sm:$0xff]
    %v149 = vld [vmem:[#allocation5 + $0x18] sm:$0xff]
    %v150 = vld [vmem:[#allocation5 + $0x20] sm:$0xff]
    %v151 = vld [vmem:[#allocation5 + $0x28] sm:$0xff]
    %v152 = vld [vmem:[#allocation5 + $0x30] sm:$0xff]
    %v153 = vld [vmem:[#allocation5 + $0x38] sm:$0xff]
    %v154 = vld [vmem:[#allocation11] sm:$0xff]
    %v155 = vld [vmem:[#allocation11 + $0x8] sm:$0xff]
    %v156 = vld [vmem:[#allocation11 + $0x10] sm:$0xff]
    %v157 = vld [vmem:[#allocation11 + $0x18] sm:$0xff]
    %v158 = vld [vmem:[#allocation11 + $0x20] sm:$0xff]
    %v159 = vld [vmem:[#allocation11 + $0x28] sm:$0xff]
    %v160 = vld [vmem:[#allocation11 + $0x30] sm:$0xff]
    %v161 = vld [vmem:[#allocation11 + $0x38] sm:$0xff]
    %v162 = vld [vmem:[#allocation11 + $0x40] sm:$0xff]
    %v163 = vld [vmem:[#allocation11 + $0x48] sm:$0xff]
    %v164 = vld [vmem:[#allocation11 + $0x50] sm:$0xff]
    %v165 = vld [vmem:[#allocation11 + $0x58] sm:$0xff]
    %v166 = vld [vmem:[#allocation11 + $0x60] sm:$0xff]
    %v167 = vld [vmem:[#allocation11 + $0x68] sm:$0xff]
    %v168 = vld [vmem:[#allocation11 + $0x70] sm:$0xff]
    %v169 = vld [vmem:[#allocation11 + $0x78] sm:$0xff]
    %v170 = vld [vmem:[%s5] sm:$0x1]
    %v172 = vlaneseq
    %v173 = vshrl.u32 %v172, 7
    %v174 = vsub.s32 0, %v173
    %v175 = vrot.slane %v170, %v174
    %177 = vmatprep.subr.mxu0 0.0
    %178 = vmatpush1.msra.mxu0 %v154
    %179 = vmatprep.subr.mxu0 0.0
    %180 = vmatpush1.msra.mxu0 %v155
    %181 = vmatprep.subr.mxu0 0.0
    %182 = vmatpush1.msra.mxu0 %v156
    %183 = vmatprep.subr.mxu0 0.0
    %184 = vmatpush1.msra.mxu0 %v157
    %185 = vmatprep.subr.mxu0 0.0
    %186 = vmatpush1.msra.mxu0 %v158
    %187 = vmatprep.subr.mxu0 0.0
    %188 = vmatpush1.msra.mxu0 %v159
    %189 = vmatprep.subr.mxu0 0.0
    %190 = vmatpush1.msra.mxu0 %v160
    %191 = vmatprep.subr.mxu0 0.0
    %192 = vmatpush1.msra.mxu0 %v161
    %193 = vmatprep.subr.mxu0 0.0
    %194 = vmatpush1.msra.mxu0 %v162
    %195 = vmatprep.subr.mxu0 0.0
    %196 = vmatpush1.msra.mxu0 %v163
    %197 = vmatprep.subr.mxu0 0.0
    %198 = vmatpush1.msra.mxu0 %v164
    %199 = vmatprep.subr.mxu0 0.0
    %200 = vmatpush1.msra.mxu0 %v165
    %201 = vmatprep.subr.mxu0 0.0
    %202 = vmatpush1.msra.mxu0 %v166
    %203 = vmatprep.subr.mxu0 0.0
    %204 = vmatpush1.msra.mxu0 %v167
    %205 = vmatprep.subr.mxu0 0.0
    %206 = vmatpush1.msra.mxu0 %v168
    %207 = vmatprep.subr.mxu0 0.0
    %208 = vmatpush1.msra.mxu0 %v169
    %209 = vmatprep.subr.mxu0 0.0
    %210 = vmatpush1.msra.mxu0 0.0
    %211 = vmatprep.subr.mxu0 0.0
    %212 = vmatpush1.msra.mxu0 0.0
    %213 = vmatprep.subr.mxu0 0.0
    %214 = vmatpush1.msra.mxu0 0.0
    %215 = vmatprep.subr.mxu0 0.0
    %216 = vmatpush1.msra.mxu0 0.0
    %217 = vmatprep.subr.mxu0 0.0
    %218 = vmatpush1.msra.mxu0 0.0
    %219 = vmatprep.subr.mxu0 0.0
    %220 = vmatpush1.msra.mxu0 0.0
    %221 = vmatprep.subr.mxu0 0.0
    %222 = vmatpush1.msra.mxu0 0.0
    %223 = vmatprep.subr.mxu0 0.0
    %224 = vmatpush1.msra.mxu0 0.0
    %225 = vmatprep.subr.mxu0 0.0
    %226 = vmatpush1.msra.mxu0 0.0
    %227 = vmatprep.subr.mxu0 0.0
    %228 = vmatpush1.msra.mxu0 0.0
    %229 = vmatprep.subr.mxu0 0.0
    %230 = vmatpush1.msra.mxu0 0.0
    %231 = vmatprep.subr.mxu0 0.0
    %232 = vmatpush1.msra.mxu0 0.0
    %233 = vmatprep.subr.mxu0 0.0
    %234 = vmatpush1.msra.mxu0 0.0
    %235 = vmatprep.subr.mxu0 0.0
    %236 = vmatpush1.msra.mxu0 0.0
    %237 = vmatprep.subr.mxu0 0.0
    %238 = vmatpush1.msra.mxu0 0.0
    %239 = vmatprep.subr.mxu0 0.0
    %240 = vmatpush1.msra.mxu0 0.0
    %241 = vmatprep.mubr.f32.mxu0 0.0
    %242 = vmatmul.mubr.f32.gmra.mrb[0].mxu0 %v146
    %v243 = vpop.f32.mrb[0].mxu0
    %v244 = vadd.f32 %v175, %v243
    %v245 = vpop.f32.mrb[0].mxu0
    %246 = vmatprep.mubr.f32.mxu0 0.0
    %247 = vmatmul.mubr.f32.gmra.mrb[0].mxu0 %v147
    %v248 = vpop.f32.mrb[0].mxu0
    %v249 = vadd.f32 %v175, %v248
    %v250 = vpop.f32.mrb[0].mxu0
    %251 = vmatprep.mubr.f32.mxu0 0.0
    %252 = vmatmul.mubr.f32.gmra.mrb[0].mxu0 %v148
    %v253 = vpop.f32.mrb[0].mxu0
    %v254 = vadd.f32 %v175, %v253
    %v255 = vpop.f32.mrb[0].mxu0
    %256 = vmatprep.mubr.f32.mxu0 0.0
    %257 = vmatmul.mubr.f32.gmra.mrb[0].mxu0 %v149
    %v258 = vpop.f32.mrb[0].mxu0
    %v259 = vadd.f32 %v175, %v258
    %v260 = vpop.f32.mrb[0].mxu0
    %261 = vmatprep.mubr.f32.mxu0 0.0
    %262 = vmatmul.mubr.f32.gmra.mrb[0].mxu0 %v150
    %v263 = vpop.f32.mrb[0].mxu0
    %v264 = vadd.f32 %v175, %v263
    %v265 = vpop.f32.mrb[0].mxu0
    %266 = vmatprep.mubr.f32.mxu0 0.0
    %267 = vmatmul.mubr.f32.gmra.mrb[0].mxu0 %v151
    %v268 = vpop.f32.mrb[0].mxu0
    %v269 = vadd.f32 %v175, %v268
    %v270 = vpop.f32.mrb[0].mxu0
    %271 = vmatprep.mubr.f32.mxu0 0.0
    %272 = vmatmul.mubr.f32.gmra.mrb[0].mxu0 %v152
    %v273 = vpop.f32.mrb[0].mxu0
    %v274 = vadd.f32 %v175, %v273
    %v275 = vpop.f32.mrb[0].mxu0
    %276 = vmatprep.mubr.f32.mxu0 0.0
    %277 = vmatmul.mubr.f32.gmra.mrb[0].mxu0 %v153
    %v278 = vpop.f32.mrb[0].mxu0
    %v279 = vadd.f32 %v175, %v278
    %v280 = vpop.f32.mrb[0].mxu0
    %281 = vdwg.mxu0
    %282 = vst [vmem:[#allocation2] sm:$0xff] %v244
    %283 = vst [vmem:[#allocation2 + $0x8] sm:$0xff] %v249
    %284 = vst [vmem:[#allocation2 + $0x10] sm:$0xff] %v254
    %285 = vst [vmem:[#allocation2 + $0x18] sm:$0xff] %v259
    %286 = vst [vmem:[#allocation2 + $0x20] sm:$0xff] %v264
    %287 = vst [vmem:[#allocation2 + $0x28] sm:$0xff] %v269
    %288 = vst [vmem:[#allocation2 + $0x30] sm:$0xff] %v274
    %289 = vst [vmem:[#allocation2 + $0x38] sm:$0xff] %v279
    %v290 = vld [vmem:[#allocation8] sm:$0xff]
    %v291 = vld [vmem:[#allocation8 + $0x8] sm:$0xff]
    %v292 = vld [vmem:[#allocation8 + $0x10] sm:$0xff]
    %v293 = vld [vmem:[#allocation8 + $0x18] sm:$0xff]
    %v294 = vld [vmem:[#allocation8 + $0x20] sm:$0xff]
    %v295 = vld [vmem:[#allocation8 + $0x28] sm:$0xff]
    %v296 = vld [vmem:[#allocation8 + $0x30] sm:$0xff]
    %v297 = vld [vmem:[#allocation8 + $0x38] sm:$0xff]
    %v298 = vld [vmem:[#allocation14] sm:$0xff]
    %v299 = vld [vmem:[#allocation14 + $0x8] sm:$0xff]
    %v300 = vld [vmem:[#allocation14 + $0x10] sm:$0xff]
    %v301 = vld [vmem:[#allocation14 + $0x18] sm:$0xff]
    %v302 = vld [vmem:[#allocation14 + $0x20] sm:$0xff]
    %v303 = vld [vmem:[#allocation14 + $0x28] sm:$0xff]
    %v304 = vld [vmem:[#allocation14 + $0x30] sm:$0xff]
    %v305 = vld [vmem:[#allocation14 + $0x38] sm:$0xff]
    %v306 = vld [vmem:[#allocation14 + $0x40] sm:$0xff]
    %v307 = vld [vmem:[#allocation14 + $0x48] sm:$0xff]
    %v308 = vld [vmem:[#allocation14 + $0x50] sm:$0xff]
    %v309 = vld [vmem:[#allocation14 + $0x58] sm:$0xff]
    %v310 = vld [vmem:[#allocation14 + $0x60] sm:$0xff]
    %v311 = vld [vmem:[#allocation14 + $0x68] sm:$0xff]
    %v312 = vld [vmem:[#allocation14 + $0x70] sm:$0xff]
    %v313 = vld [vmem:[#allocation14 + $0x78] sm:$0xff]
    %v314 = vld [vmem:[%s8] sm:$0x1]
    %v316 = vlaneseq
    %v317 = vshrl.u32 %v316, 7
    %v318 = vsub.s32 0, %v317
    %v319 = vrot.slane %v314, %v318
    %321 = vmatprep.subr.mxu0 0.0
    %322 = vmatpush1.msra.mxu0 %v298
    %323 = vmatprep.subr.mxu0 0.0
    %324 = vmatpush1.msra.mxu0 %v299
    %325 = vmatprep.subr.mxu0 0.0
    %326 = vmatpush1.msra.mxu0 %v300
    %327 = vmatprep.subr.mxu0 0.0
    %328 = vmatpush1.msra.mxu0 %v301
    %329 = vmatprep.subr.mxu0 0.0
    %330 = vmatpush1.msra.mxu0 %v302
    %331 = vmatprep.subr.mxu0 0.0
    %332 = vmatpush1.msra.mxu0 %v303
    %333 = vmatprep.subr.mxu0 0.0
    %334 = vmatpush1.msra.mxu0 %v304
    %335 = vmatprep.subr.mxu0 0.0
    %336 = vmatpush1.msra.mxu0 %v305
    %337 = vmatprep.subr.mxu0 0.0
    %338 = vmatpush1.msra.mxu0 %v306
    %339 = vmatprep.subr.mxu0 0.0
    %340 = vmatpush1.msra.mxu0 %v307
    %341 = vmatprep.subr.mxu0 0.0
    %342 = vmatpush1.msra.mxu0 %v308
    %343 = vmatprep.subr.mxu0 0.0
    %344 = vmatpush1.msra.mxu0 %v309
    %345 = vmatprep.subr.mxu0 0.0
    %346 = vmatpush1.msra.mxu0 %v310
    %347 = vmatprep.subr.mxu0 0.0
    %348 = vmatpush1.msra.mxu0 %v311
    %349 = vmatprep.subr.mxu0 0.0
    %350 = vmatpush1.msra.mxu0 %v312
    %351 = vmatprep.subr.mxu0 0.0
    %352 = vmatpush1.msra.mxu0 %v313
    %353 = vmatprep.subr.mxu0 0.0
    %354 = vmatpush1.msra.mxu0 0.0
    %355 = vmatprep.subr.mxu0 0.0
    %356 = vmatpush1.msra.mxu0 0.0
    %357 = vmatprep.subr.mxu0 0.0
    %358 = vmatpush1.msra.mxu0 0.0
    %359 = vmatprep.subr.mxu0 0.0
    %360 = vmatpush1.msra.mxu0 0.0
    %361 = vmatprep.subr.mxu0 0.0
    %362 = vmatpush1.msra.mxu0 0.0
    %363 = vmatprep.subr.mxu0 0.0
    %364 = vmatpush1.msra.mxu0 0.0
    %365 = vmatprep.subr.mxu0 0.0
    %366 = vmatpush1.msra.mxu0 0.0
    %367 = vmatprep.subr.mxu0 0.0
    %368 = vmatpush1.msra.mxu0 0.0
    %369 = vmatprep.subr.mxu0 0.0
    %370 = vmatpush1.msra.mxu0 0.0
    %371 = vmatprep.subr.mxu0 0.0
    %372 = vmatpush1.msra.mxu0 0.0
    %373 = vmatprep.subr.mxu0 0.0
    %374 = vmatpush1.msra.mxu0 0.0
    %375 = vmatprep.subr.mxu0 0.0
    %376 = vmatpush1.msra.mxu0 0.0
    %377 = vmatprep.subr.mxu0 0.0
    %378 = vmatpush1.msra.mxu0 0.0
    %379 = vmatprep.subr.mxu0 0.0
    %380 = vmatpush1.msra.mxu0 0.0
    %381 = vmatprep.subr.mxu0 0.0
    %382 = vmatpush1.msra.mxu0 0.0
    %383 = vmatprep.subr.mxu0 0.0
    %384 = vmatpush1.msra.mxu0 0.0
    %385 = vmatprep.mubr.f32.mxu0 0.0
    %386 = vmatmul.mubr.f32.gmra.mrb[0].mxu0 %v290
    %v387 = vpop.f32.mrb[0].mxu0
    %v388 = vadd.f32 %v319, %v387
    %v389 = vpop.f32.mrb[0].mxu0
    %390 = vmatprep.mubr.f32.mxu0 0.0
    %391 = vmatmul.mubr.f32.gmra.mrb[0].mxu0 %v291
    %v392 = vpop.f32.mrb[0].mxu0
    %v393 = vadd.f32 %v319, %v392
    %v394 = vpop.f32.mrb[0].mxu0
    %395 = vmatprep.mubr.f32.mxu0 0.0
    %396 = vmatmul.mubr.f32.gmra.mrb[0].mxu0 %v292
    %v397 = vpop.f32.mrb[0].mxu0
    %v398 = vadd.f32 %v319, %v397
    %v399 = vpop.f32.mrb[0].mxu0
    %400 = vmatprep.mubr.f32.mxu0 0.0
    %401 = vmatmul.mubr.f32.gmra.mrb[0].mxu0 %v293
    %v402 = vpop.f32.mrb[0].mxu0
    %v403 = vadd.f32 %v319, %v402
    %v404 = vpop.f32.mrb[0].mxu0
    %405 = vmatprep.mubr.f32.mxu0 0.0
    %406 = vmatmul.mubr.f32.gmra.mrb[0].mxu0 %v294
    %v407 = vpop.f32.mrb[0].mxu0
    %v408 = vadd.f32 %v319, %v407
    %v409 = vpop.f32.mrb[0].mxu0
    %410 = vmatprep.mubr.f32.mxu0 0.0
    %411 = vmatmul.mubr.f32.gmra.mrb[0].mxu0 %v295
    %v412 = vpop.f32.mrb[0].mxu0
    %v413 = vadd.f32 %v319, %v412
    %v414 = vpop.f32.mrb[0].mxu0
    %415 = vmatprep.mubr.f32.mxu0 0.0
    %416 = vmatmul.mubr.f32.gmra.mrb[0].mxu0 %v296
    %v417 = vpop.f32.mrb[0].mxu0
    %v418 = vadd.f32 %v319, %v417
    %v419 = vpop.f32.mrb[0].mxu0
    %420 = vmatprep.mubr.f32.mxu0 0.0
    %421 = vmatmul.mubr.f32.gmra.mrb[0].mxu0 %v297
    %v422 = vpop.f32.mrb[0].mxu0
    %v423 = vadd.f32 %v319, %v422
    %v424 = vpop.f32.mrb[0].mxu0
    %425 = vdwg.mxu0
    %426 = vst [vmem:[#allocation3] sm:$0xff] %v388
    %427 = vst [vmem:[#allocation3 + $0x8] sm:$0xff] %v393
    %428 = vst [vmem:[#allocation3 + $0x10] sm:$0xff] %v398
    %429 = vst [vmem:[#allocation3 + $0x18] sm:$0xff] %v403
    %430 = vst [vmem:[#allocation3 + $0x20] sm:$0xff] %v408
    %431 = vst [vmem:[#allocation3 + $0x28] sm:$0xff] %v413
    %432 = vst [vmem:[#allocation3 + $0x30] sm:$0xff] %v418
    %433 = vst [vmem:[#allocation3 + $0x38] sm:$0xff] %v423
    %v434 = vld [vmem:[#allocation13] sm:$0xff]
    %v435 = vld [vmem:[#allocation13 + $0x8] sm:$0xff]
    %v436 = vld [vmem:[#allocation13 + $0x10] sm:$0xff]
    %v437 = vld [vmem:[#allocation13 + $0x18] sm:$0xff]
    %v438 = vld [vmem:[#allocation13 + $0x20] sm:$0xff]
    %v439 = vld [vmem:[#allocation13 + $0x28] sm:$0xff]
    %v440 = vld [vmem:[#allocation13 + $0x30] sm:$0xff]
    %v441 = vld [vmem:[#allocation13 + $0x38] sm:$0xff]
    %v442 = vld [vmem:[#allocation13 + $0x40] sm:$0xff]
    %v443 = vld [vmem:[#allocation13 + $0x48] sm:$0xff]
    %v444 = vld [vmem:[#allocation13 + $0x50] sm:$0xff]
    %v445 = vld [vmem:[#allocation13 + $0x58] sm:$0xff]
    %v446 = vld [vmem:[#allocation13 + $0x60] sm:$0xff]
    %v447 = vld [vmem:[#allocation13 + $0x68] sm:$0xff]
    %v448 = vld [vmem:[#allocation13 + $0x70] sm:$0xff]
    %v449 = vld [vmem:[#allocation13 + $0x78] sm:$0xff]
    %v450 = vld [vmem:[#allocation16] sm:$0xff]
    %v451 = vld [vmem:[#allocation16 + $0x8] sm:$0xff]
    %v452 = vld [vmem:[#allocation16 + $0x10] sm:$0xff]
    %v453 = vld [vmem:[#allocation16 + $0x18] sm:$0xff]
    %v454 = vld [vmem:[#allocation16 + $0x20] sm:$0xff]
    %v455 = vld [vmem:[#allocation16 + $0x28] sm:$0xff]
    %v456 = vld [vmem:[#allocation16 + $0x30] sm:$0xff]
    %v457 = vld [vmem:[#allocation16 + $0x38] sm:$0xff]
    %v458 = vld [vmem:[#allocation16 + $0x40] sm:$0xff]
    %v459 = vld [vmem:[#allocation16 + $0x48] sm:$0xff]
    %v460 = vld [vmem:[#allocation16 + $0x50] sm:$0xff]
    %v461 = vld [vmem:[#allocation16 + $0x58] sm:$0xff]
    %v462 = vld [vmem:[#allocation16 + $0x60] sm:$0xff]
    %v463 = vld [vmem:[#allocation16 + $0x68] sm:$0xff]
    %v464 = vld [vmem:[#allocation16 + $0x70] sm:$0xff]
    %v465 = vld [vmem:[#allocation16 + $0x78] sm:$0xff]
    %v466 = vld [vmem:[#allocation10] sm:$0xff]
    %v467 = vld [vmem:[#allocation2] sm:$0xff]
    %468 = vmatprep.subr.mxu0 0.0
    %469 = vmatpush1.msra.mxu0 %v434
    %470 = vmatprep.subr.mxu0 0.0
    %471 = vmatpush1.msra.mxu0 %v435
    %472 = vmatprep.subr.mxu0 0.0
    %473 = vmatpush1.msra.mxu0 %v436
    %474 = vmatprep.subr.mxu0 0.0
    %475 = vmatpush1.msra.mxu0 %v437
    %476 = vmatprep.subr.mxu0 0.0
    %477 = vmatpush1.msra.mxu0 %v438
    %478 = vmatprep.subr.mxu0 0.0
    %479 = vmatpush1.msra.mxu0 %v439
    %480 = vmatprep.subr.mxu0 0.0
    %481 = vmatpush1.msra.mxu0 %v440
    %482 = vmatprep.subr.mxu0 0.0
    %483 = vmatpush1.msra.mxu0 %v441
    %484 = vmatprep.subr.mxu0 0.0
    %485 = vmatpush1.msra.mxu0 %v442
    %486 = vmatprep.subr.mxu0 0.0
    %487 = vmatpush1.msra.mxu0 %v443
    %488 = vmatprep.subr.mxu0 0.0
    %489 = vmatpush1.msra.mxu0 %v444
    %490 = vmatprep.subr.mxu0 0.0
    %491 = vmatpush1.msra.mxu0 %v445
    %492 = vmatprep.subr.mxu0 0.0
    %493 = vmatpush1.msra.mxu0 %v446
    %494 = vmatprep.subr.mxu0 0.0
    %495 = vmatpush1.msra.mxu0 %v447
    %496 = vmatprep.subr.mxu0 0.0
    %497 = vmatpush1.msra.mxu0 %v448
    %498 = vmatprep.subr.mxu0 0.0
    %499 = vmatpush1.msra.mxu0 %v449
    %500 = vmatprep.subr.mxu0 0.0
    %501 = vmatpush1.msra.mxu0 0.0
    %502 = vmatprep.subr.mxu0 0.0
    %503 = vmatpush1.msra.mxu0 0.0
    %504 = vmatprep.subr.mxu0 0.0
    %505 = vmatpush1.msra.mxu0 0.0
    %506 = vmatprep.subr.mxu0 0.0
    %507 = vmatpush1.msra.mxu0 0.0
    %508 = vmatprep.subr.mxu0 0.0
    %509 = vmatpush1.msra.mxu0 0.0
    %510 = vmatprep.subr.mxu0 0.0
    %511 = vmatpush1.msra.mxu0 0.0
    %512 = vmatprep.subr.mxu0 0.0
    %513 = vmatpush1.msra.mxu0 0.0
    %514 = vmatprep.subr.mxu0 0.0
    %515 = vmatpush1.msra.mxu0 0.0
    %516 = vmatprep.subr.mxu0 0.0
    %517 = vmatpush1.msra.mxu0 0.0
    %518 = vmatprep.subr.mxu0 0.0
    %519 = vmatpush1.msra.mxu0 0.0
    %520 = vmatprep.subr.mxu0 0.0
    %521 = vmatpush1.msra.mxu0 0.0
    %522 = vmatprep.subr.mxu0 0.0
    %523 = vmatpush1.msra.mxu0 0.0
    %524 = vmatprep.subr.mxu0 0.0
    %525 = vmatpush1.msra.mxu0 0.0
    %526 = vmatprep.subr.mxu0 0.0
    %527 = vmatpush1.msra.mxu0 0.0
    %528 = vmatprep.subr.mxu0 0.0
    %529 = vmatpush1.msra.mxu0 0.0
    %530 = vmatprep.subr.mxu0 0.0
    %531 = vmatpush1.msra.mxu0 0.0
    %532 = vmatprep.mubr.f32.mxu0 0.0
    %533 = vmatmul.mubr.f32.gmra.mrb[0].mxu0 %v466
    %v534 = vpop.f32.mrb[0].mxu0
    %v535 = vadd.f32 0.0, %v534
    %v536 = vpop.f32.mrb[0].mxu0
    %537 = vdwg.mxu0
    %v538 = vadd.f32 %v467, %v535
    %v539 = vtanh.pop %v538
    %s540 = scalar_lea.vmem [#allocation2], 8
    %v541 = vld [vmem:[%s540] sm:$0xff]
    %542 = vmatprep.subr.mxu0 0.0
    %543 = vmatpush1.msra.mxu0 %v434
    %544 = vmatprep.subr.mxu0 0.0
    %545 = vmatpush1.msra.mxu0 %v435
    %546 = vmatprep.subr.mxu0 0.0
    %547 = vmatpush1.msra.mxu0 %v436
    %548 = vmatprep.subr.mxu0 0.0
    %549 = vmatpush1.msra.mxu0 %v437
    %550 = vmatprep.subr.mxu0 0.0
    %551 = vmatpush1.msra.mxu0 %v438
    %552 = vmatprep.subr.mxu0 0.0
    %553 = vmatpush1.msra.mxu0 %v439
    %554 = vmatprep.subr.mxu0 0.0
    %555 = vmatpush1.msra.mxu0 %v440
    %556 = vmatprep.subr.mxu0 0.0
    %557 = vmatpush1.msra.mxu0 %v441
    %558 = vmatprep.subr.mxu0 0.0
    %559 = vmatpush1.msra.mxu0 %v442
    %560 = vmatprep.subr.mxu0 0.0
    %561 = vmatpush1.msra.mxu0 %v443
    %562 = vmatprep.subr.mxu0 0.0
    %563 = vmatpush1.msra.mxu0 %v444
    %564 = vmatprep.subr.mxu0 0.0
    %565 = vmatpush1.msra.mxu0 %v445
    %566 = vmatprep.subr.mxu0 0.0
    %567 = vmatpush1.msra.mxu0 %v446
    %568 = vmatprep.subr.mxu0 0.0
    %569 = vmatpush1.msra.mxu0 %v447
    %570 = vmatprep.subr.mxu0 0.0
    %571 = vmatpush1.msra.mxu0 %v448
    %572 = vmatprep.subr.mxu0 0.0
    %573 = vmatpush1.msra.mxu0 %v449
    %574 = vmatprep.subr.mxu0 0.0
    %575 = vmatpush1.msra.mxu0 0.0
    %576 = vmatprep.subr.mxu0 0.0
    %577 = vmatpush1.msra.mxu0 0.0
    %578 = vmatprep.subr.mxu0 0.0
    %579 = vmatpush1.msra.mxu0 0.0
    %580 = vmatprep.subr.mxu0 0.0
    %581 = vmatpush1.msra.mxu0 0.0
    %582 = vmatprep.subr.mxu0 0.0
    %583 = vmatpush1.msra.mxu0 0.0
    %584 = vmatprep.subr.mxu0 0.0
    %585 = vmatpush1.msra.mxu0 0.0
    %586 = vmatprep.subr.mxu0 0.0
    %587 = vmatpush1.msra.mxu0 0.0
    %588 = vmatprep.subr.mxu0 0.0
    %589 = vmatpush1.msra.mxu0 0.0
    %590 = vmatprep.subr.mxu0 0.0
    %591 = vmatpush1.msra.mxu0 0.0
    %592 = vmatprep.subr.mxu0 0.0
    %593 = vmatpush1.msra.mxu0 0.0
    %594 = vmatprep.subr.mxu0 0.0
    %595 = vmatpush1.msra.mxu0 0.0
    %596 = vmatprep.subr.mxu0 0.0
    %597 = vmatpush1.msra.mxu0 0.0
    %598 = vmatprep.subr.mxu0 0.0
    %599 = vmatpush1.msra.mxu0 0.0
    %600 = vmatprep.subr.mxu0 0.0
    %601 = vmatpush1.msra.mxu0 0.0
    %602 = vmatprep.subr.mxu0 0.0
    %603 = vmatpush1.msra.mxu0 0.0
    %604 = vmatprep.subr.mxu0 0.0
    %605 = vmatpush1.msra.mxu0 0.0
    %606 = vmatprep.mubr.f32.mxu0 0.0
    %607 = vmatmul.mubr.f32.gmra.mrb[0].mxu0 %v539
    %v608 = vpop.f32.mrb[0].mxu0
    %v609 = vadd.f32 0.0, %v608
    %v610 = vpop.f32.mrb[0].mxu0
    %611 = vdwg.mxu0
    %v612 = vadd.f32 %v541, %v609
    %v613 = vtanh.pop %v612
    %s614 = scalar_lea.vmem [#allocation2], 16
    %v615 = vld [vmem:[%s614] sm:$0xff]
    %616 = vmatprep.subr.mxu0 0.0
    %617 = vmatpush1.msra.mxu0 %v434
    %618 = vmatprep.subr.mxu0 0.0
    %619 = vmatpush1.msra.mxu0 %v435
    %620 = vmatprep.subr.mxu0 0.0
    %621 = vmatpush1.msra.mxu0 %v436
    %622 = vmatprep.subr.mxu0 0.0
    %623 = vmatpush1.msra.mxu0 %v437
    %624 = vmatprep.subr.mxu0 0.0
    %625 = vmatpush1.msra.mxu0 %v438
    %626 = vmatprep.subr.mxu0 0.0
    %627 = vmatpush1.msra.mxu0 %v439
    %628 = vmatprep.subr.mxu0 0.0
    %629 = vmatpush1.msra.mxu0 %v440
    %630 = vmatprep.subr.mxu0 0.0
    %631 = vmatpush1.msra.mxu0 %v441
    %632 = vmatprep.subr.mxu0 0.0
    %633 = vmatpush1.msra.mxu0 %v442
    %634 = vmatprep.subr.mxu0 0.0
    %635 = vmatpush1.msra.mxu0 %v443
    %636 = vmatprep.subr.mxu0 0.0
    %637 = vmatpush1.msra.mxu0 %v444
    %638 = vmatprep.subr.mxu0 0.0
    %639 = vmatpush1.msra.mxu0 %v445
    %640 = vmatprep.subr.mxu0 0.0
    %641 = vmatpush1.msra.mxu0 %v446
    %642 = vmatprep.subr.mxu0 0.0
    %643 = vmatpush1.msra.mxu0 %v447
    %644 = vmatprep.subr.mxu0 0.0
    %645 = vmatpush1.msra.mxu0 %v448
    %646 = vmatprep.subr.mxu0 0.0
    %647 = vmatpush1.msra.mxu0 %v449
    %648 = vmatprep.subr.mxu0 0.0
    %649 = vmatpush1.msra.mxu0 0.0
    %650 = vmatprep.subr.mxu0 0.0
    %651 = vmatpush1.msra.mxu0 0.0
    %652 = vmatprep.subr.mxu0 0.0
    %653 = vmatpush1.msra.mxu0 0.0
    %654 = vmatprep.subr.mxu0 0.0
    %655 = vmatpush1.msra.mxu0 0.0
    %656 = vmatprep.subr.mxu0 0.0
    %657 = vmatpush1.msra.mxu0 0.0
    %658 = vmatprep.subr.mxu0 0.0
    %659 = vmatpush1.msra.mxu0 0.0
    %660 = vmatprep.subr.mxu0 0.0
    %661 = vmatpush1.msra.mxu0 0.0
    %662 = vmatprep.subr.mxu0 0.0
    %663 = vmatpush1.msra.mxu0 0.0
    %664 = vmatprep.subr.mxu0 0.0
    %665 = vmatpush1.msra.mxu0 0.0
    %666 = vmatprep.subr.mxu0 0.0
    %667 = vmatpush1.msra.mxu0 0.0
    %668 = vmatprep.subr.mxu0 0.0
    %669 = vmatpush1.msra.mxu0 0.0
    %670 = vmatprep.subr.mxu0 0.0
    %671 = vmatpush1.msra.mxu0 0.0
    %672 = vmatprep.subr.mxu0 0.0
    %673 = vmatpush1.msra.mxu0 0.0
    %674 = vmatprep.subr.mxu0 0.0
    %675 = vmatpush1.msra.mxu0 0.0
    %676 = vmatprep.subr.mxu0 0.0
    %677 = vmatpush1.msra.mxu0 0.0
    %678 = vmatprep.subr.mxu0 0.0
    %679 = vmatpush1.msra.mxu0 0.0
    %680 = vmatprep.mubr.f32.mxu0 0.0
    %681 = vmatmul.mubr.f32.gmra.mrb[0].mxu0 %v613
    %v682 = vpop.f32.mrb[0].mxu0
    %v683 = vadd.f32 0.0, %v682
    %v684 = vpop.f32.mrb[0].mxu0
    %685 = vdwg.mxu0
    %v686 = vadd.f32 %v615, %v683
    %v687 = vtanh.pop %v686
    %s688 = scalar_lea.vmem [#allocation2], 24
    %v689 = vld [vmem:[%s688] sm:$0xff]
    %690 = vmatprep.subr.mxu0 0.0
    %691 = vmatpush1.msra.mxu0 %v434
    %692 = vmatprep.subr.mxu0 0.0
    %693 = vmatpush1.msra.mxu0 %v435
    %694 = vmatprep.subr.mxu0 0.0
    %695 = vmatpush1.msra.mxu0 %v436
    %696 = vmatprep.subr.mxu0 0.0
    %697 = vmatpush1.msra.mxu0 %v437
    %698 = vmatprep.subr.mxu0 0.0
    %699 = vmatpush1.msra.mxu0 %v438
    %700 = vmatprep.subr.mxu0 0.0
    %701 = vmatpush1.msra.mxu0 %v439
    %702 = vmatprep.subr.mxu0 0.0
    %703 = vmatpush1.msra.mxu0 %v440
    %704 = vmatprep.subr.mxu0 0.0
    %705 = vmatpush1.msra.mxu0 %v441
    %706 = vmatprep.subr.mxu0 0.0
    %707 = vmatpush1.msra.mxu0 %v442
    %708 = vmatprep.subr.mxu0 0.0
    %709 = vmatpush1.msra.mxu0 %v443
    %710 = vmatprep.subr.mxu0 0.0
    %711 = vmatpush1.msra.mxu0 %v444
    %712 = vmatprep.subr.mxu0 0.0
    %713 = vmatpush1.msra.mxu0 %v445
    %714 = vmatprep.subr.mxu0 0.0
    %715 = vmatpush1.msra.mxu0 %v446
    %716 = vmatprep.subr.mxu0 0.0
    %717 = vmatpush1.msra.mxu0 %v447
    %718 = vmatprep.subr.mxu0 0.0
    %719 = vmatpush1.msra.mxu0 %v448
    %720 = vmatprep.subr.mxu0 0.0
    %721 = vmatpush1.msra.mxu0 %v449
    %722 = vmatprep.subr.mxu0 0.0
    %723 = vmatpush1.msra.mxu0 0.0
    %724 = vmatprep.subr.mxu0 0.0
    %725 = vmatpush1.msra.mxu0 0.0
    %726 = vmatprep.subr.mxu0 0.0
    %727 = vmatpush1.msra.mxu0 0.0
    %728 = vmatprep.subr.mxu0 0.0
    %729 = vmatpush1.msra.mxu0 0.0
    %730 = vmatprep.subr.mxu0 0.0
    %731 = vmatpush1.msra.mxu0 0.0
    %732 = vmatprep.subr.mxu0 0.0
    %733 = vmatpush1.msra.mxu0 0.0
    %734 = vmatprep.subr.mxu0 0.0
    %735 = vmatpush1.msra.mxu0 0.0
    %736 = vmatprep.subr.mxu0 0.0
    %737 = vmatpush1.msra.mxu0 0.0
    %738 = vmatprep.subr.mxu0 0.0
    %739 = vmatpush1.msra.mxu0 0.0
    %740 = vmatprep.subr.mxu0 0.0
    %741 = vmatpush1.msra.mxu0 0.0
    %742 = vmatprep.subr.mxu0 0.0
    %743 = vmatpush1.msra.mxu0 0.0
    %744 = vmatprep.subr.mxu0 0.0
    %745 = vmatpush1.msra.mxu0 0.0
    %746 = vmatprep.subr.mxu0 0.0
    %747 = vmatpush1.msra.mxu0 0.0
    %748 = vmatprep.subr.mxu0 0.0
    %749 = vmatpush1.msra.mxu0 0.0
    %750 = vmatprep.subr.mxu0 0.0
    %751 = vmatpush1.msra.mxu0 0.0
    %752 = vmatprep.subr.mxu0 0.0
    %753 = vmatpush1.msra.mxu0 0.0
    %754 = vmatprep.mubr.f32.mxu0 0.0
    %755 = vmatmul.mubr.f32.gmra.mrb[0].mxu0 %v687
    %v756 = vpop.f32.mrb[0].mxu0
    %v757 = vadd.f32 0.0, %v756
    %v758 = vpop.f32.mrb[0].mxu0
    %759 = vdwg.mxu0
    %v760 = vadd.f32 %v689, %v757
    %v761 = vtanh.pop %v760
    %s762 = scalar_lea.vmem [#allocation2], 32
    %v763 = vld [vmem:[%s762] sm:$0xff]
    %764 = vmatprep.subr.mxu0 0.0
    %765 = vmatpush1.msra.mxu0 %v434
    %766 = vmatprep.subr.mxu0 0.0
    %767 = vmatpush1.msra.mxu0 %v435
    %768 = vmatprep.subr.mxu0 0.0
    %769 = vmatpush1.msra.mxu0 %v436
    %770 = vmatprep.subr.mxu0 0.0
    %771 = vmatpush1.msra.mxu0 %v437
    %772 = vmatprep.subr.mxu0 0.0
    %773 = vmatpush1.msra.mxu0 %v438
    %774 = vmatprep.subr.mxu0 0.0
    %775 = vmatpush1.msra.mxu0 %v439
    %776 = vmatprep.subr.mxu0 0.0
    %777 = vmatpush1.msra.mxu0 %v440
    %778 = vmatprep.subr.mxu0 0.0
    %779 = vmatpush1.msra.mxu0 %v441
    %780 = vmatprep.subr.mxu0 0.0
    %781 = vmatpush1.msra.mxu0 %v442
    %782 = vmatprep.subr.mxu0 0.0
    %783 = vmatpush1.msra.mxu0 %v443
    %784 = vmatprep.subr.mxu0 0.0
    %785 = vmatpush1.msra.mxu0 %v444
    %786 = vmatprep.subr.mxu0 0.0
    %787 = vmatpush1.msra.mxu0 %v445
    %788 = vmatprep.subr.mxu0 0.0
    %789 = vmatpush1.msra.mxu0 %v446
    %790 = vmatprep.subr.mxu0 0.0
    %791 = vmatpush1.msra.mxu0 %v447
    %792 = vmatprep.subr.mxu0 0.0
    %793 = vmatpush1.msra.mxu0 %v448
    %794 = vmatprep.subr.mxu0 0.0
    %795 = vmatpush1.msra.mxu0 %v449
    %796 = vmatprep.subr.mxu0 0.0
    %797 = vmatpush1.msra.mxu0 0.0
    %798 = vmatprep.subr.mxu0 0.0
    %799 = vmatpush1.msra.mxu0 0.0
    %800 = vmatprep.subr.mxu0 0.0
    %801 = vmatpush1.msra.mxu0 0.0
    %802 = vmatprep.subr.mxu0 0.0
    %803 = vmatpush1.msra.mxu0 0.0
    %804 = vmatprep.subr.mxu0 0.0
    %805 = vmatpush1.msra.mxu0 0.0
    %806 = vmatprep.subr.mxu0 0.0
    %807 = vmatpush1.msra.mxu0 0.0
    %808 = vmatprep.subr.mxu0 0.0
    %809 = vmatpush1.msra.mxu0 0.0
    %810 = vmatprep.subr.mxu0 0.0
    %811 = vmatpush1.msra.mxu0 0.0
    %812 = vmatprep.subr.mxu0 0.0
    %813 = vmatpush1.msra.mxu0 0.0
    %814 = vmatprep.subr.mxu0 0.0
    %815 = vmatpush1.msra.mxu0 0.0
    %816 = vmatprep.subr.mxu0 0.0
    %817 = vmatpush1.msra.mxu0 0.0
    %818 = vmatprep.subr.mxu0 0.0
    %819 = vmatpush1.msra.mxu0 0.0
    %820 = vmatprep.subr.mxu0 0.0
    %821 = vmatpush1.msra.mxu0 0.0
    %822 = vmatprep.subr.mxu0 0.0
    %823 = vmatpush1.msra.mxu0 0.0
    %824 = vmatprep.subr.mxu0 0.0
    %825 = vmatpush1.msra.mxu0 0.0
    %826 = vmatprep.subr.mxu0 0.0
    %827 = vmatpush1.msra.mxu0 0.0
    %828 = vmatprep.mubr.f32.mxu0 0.0
    %829 = vmatmul.mubr.f32.gmra.mrb[0].mxu0 %v761
    %v830 = vpop.f32.mrb[0].mxu0
    %v831 = vadd.f32 0.0, %v830
    %v832 = vpop.f32.mrb[0].mxu0
    %833 = vdwg.mxu0
    %v834 = vadd.f32 %v763, %v831
    %v835 = vtanh.pop %v834
    %s836 = scalar_lea.vmem [#allocation2], 40
    %v837 = vld [vmem:[%s836] sm:$0xff]
    %838 = vmatprep.subr.mxu0 0.0
    %839 = vmatpush1.msra.mxu0 %v434
    %840 = vmatprep.subr.mxu0 0.0
    %841 = vmatpush1.msra.mxu0 %v435
    %842 = vmatprep.subr.mxu0 0.0
    %843 = vmatpush1.msra.mxu0 %v436
    %844 = vmatprep.subr.mxu0 0.0
    %845 = vmatpush1.msra.mxu0 %v437
    %846 = vmatprep.subr.mxu0 0.0
    %847 = vmatpush1.msra.mxu0 %v438
    %848 = vmatprep.subr.mxu0 0.0
    %849 = vmatpush1.msra.mxu0 %v439
    %850 = vmatprep.subr.mxu0 0.0
    %851 = vmatpush1.msra.mxu0 %v440
    %852 = vmatprep.subr.mxu0 0.0
    %853 = vmatpush1.msra.mxu0 %v441
    %854 = vmatprep.subr.mxu0 0.0
    %855 = vmatpush1.msra.mxu0 %v442
    %856 = vmatprep.subr.mxu0 0.0
    %857 = vmatpush1.msra.mxu0 %v443
    %858 = vmatprep.subr.mxu0 0.0
    %859 = vmatpush1.msra.mxu0 %v444
    %860 = vmatprep.subr.mxu0 0.0
    %861 = vmatpush1.msra.mxu0 %v445
    %862 = vmatprep.subr.mxu0 0.0
    %863 = vmatpush1.msra.mxu0 %v446
    %864 = vmatprep.subr.mxu0 0.0
    %865 = vmatpush1.msra.mxu0 %v447
    %866 = vmatprep.subr.mxu0 0.0
    %867 = vmatpush1.msra.mxu0 %v448
    %868 = vmatprep.subr.mxu0 0.0
    %869 = vmatpush1.msra.mxu0 %v449
    %870 = vmatprep.subr.mxu0 0.0
    %871 = vmatpush1.msra.mxu0 0.0
    %872 = vmatprep.subr.mxu0 0.0
    %873 = vmatpush1.msra.mxu0 0.0
    %874 = vmatprep.subr.mxu0 0.0
    %875 = vmatpush1.msra.mxu0 0.0
    %876 = vmatprep.subr.mxu0 0.0
    %877 = vmatpush1.msra.mxu0 0.0
    %878 = vmatprep.subr.mxu0 0.0
    %879 = vmatpush1.msra.mxu0 0.0
    %880 = vmatprep.subr.mxu0 0.0
    %881 = vmatpush1.msra.mxu0 0.0
    %882 = vmatprep.subr.mxu0 0.0
    %883 = vmatpush1.msra.mxu0 0.0
    %884 = vmatprep.subr.mxu0 0.0
    %885 = vmatpush1.msra.mxu0 0.0
    %886 = vmatprep.subr.mxu0 0.0
    %887 = vmatpush1.msra.mxu0 0.0
    %888 = vmatprep.subr.mxu0 0.0
    %889 = vmatpush1.msra.mxu0 0.0
    %890 = vmatprep.subr.mxu0 0.0
    %891 = vmatpush1.msra.mxu0 0.0
    %892 = vmatprep.subr.mxu0 0.0
    %893 = vmatpush1.msra.mxu0 0.0
    %894 = vmatprep.subr.mxu0 0.0
    %895 = vmatpush1.msra.mxu0 0.0
    %896 = vmatprep.subr.mxu0 0.0
    %897 = vmatpush1.msra.mxu0 0.0
    %898 = vmatprep.subr.mxu0 0.0
    %899 = vmatpush1.msra.mxu0 0.0
    %900 = vmatprep.subr.mxu0 0.0
    %901 = vmatpush1.msra.mxu0 0.0
    %902 = vmatprep.mubr.f32.mxu0 0.0
    %903 = vmatmul.mubr.f32.gmra.mrb[0].mxu0 %v835
    %v904 = vpop.f32.mrb[0].mxu0
    %v905 = vadd.f32 0.0, %v904
    %v906 = vpop.f32.mrb[0].mxu0
    %907 = vdwg.mxu0
    %v908 = vadd.f32 %v837, %v905
    %v909 = vtanh.pop %v908
    %s910 = scalar_lea.vmem [#allocation2], 48
    %v911 = vld [vmem:[%s910] sm:$0xff]
    %912 = vmatprep.subr.mxu0 0.0
    %913 = vmatpush1.msra.mxu0 %v434
    %914 = vmatprep.subr.mxu0 0.0
    %915 = vmatpush1.msra.mxu0 %v435
    %916 = vmatprep.subr.mxu0 0.0
    %917 = vmatpush1.msra.mxu0 %v436
    %918 = vmatprep.subr.mxu0 0.0
    %919 = vmatpush1.msra.mxu0 %v437
    %920 = vmatprep.subr.mxu0 0.0
    %921 = vmatpush1.msra.mxu0 %v438
    %922 = vmatprep.subr.mxu0 0.0
    %923 = vmatpush1.msra.mxu0 %v439
    %924 = vmatprep.subr.mxu0 0.0
    %925 = vmatpush1.msra.mxu0 %v440
    %926 = vmatprep.subr.mxu0 0.0
    %927 = vmatpush1.msra.mxu0 %v441
    %928 = vmatprep.subr.mxu0 0.0
    %929 = vmatpush1.msra.mxu0 %v442
    %930 = vmatprep.subr.mxu0 0.0
    %931 = vmatpush1.msra.mxu0 %v443
    %932 = vmatprep.subr.mxu0 0.0
    %933 = vmatpush1.msra.mxu0 %v444
    %934 = vmatprep.subr.mxu0 0.0
    %935 = vmatpush1.msra.mxu0 %v445
    %936 = vmatprep.subr.mxu0 0.0
    %937 = vmatpush1.msra.mxu0 %v446
    %938 = vmatprep.subr.mxu0 0.0
    %939 = vmatpush1.msra.mxu0 %v447
    %940 = vmatprep.subr.mxu0 0.0
    %941 = vmatpush1.msra.mxu0 %v448
    %942 = vmatprep.subr.mxu0 0.0
    %943 = vmatpush1.msra.mxu0 %v449
    %944 = vmatprep.subr.mxu0 0.0
    %945 = vmatpush1.msra.mxu0 0.0
    %946 = vmatprep.subr.mxu0 0.0
    %947 = vmatpush1.msra.mxu0 0.0
    %948 = vmatprep.subr.mxu0 0.0
    %949 = vmatpush1.msra.mxu0 0.0
    %950 = vmatprep.subr.mxu0 0.0
    %951 = vmatpush1.msra.mxu0 0.0
    %952 = vmatprep.subr.mxu0 0.0
    %953 = vmatpush1.msra.mxu0 0.0
    %954 = vmatprep.subr.mxu0 0.0
    %955 = vmatpush1.msra.mxu0 0.0
    %956 = vmatprep.subr.mxu0 0.0
    %957 = vmatpush1.msra.mxu0 0.0
    %958 = vmatprep.subr.mxu0 0.0
    %959 = vmatpush1.msra.mxu0 0.0
    %960 = vmatprep.subr.mxu0 0.0
    %961 = vmatpush1.msra.mxu0 0.0
    %962 = vmatprep.subr.mxu0 0.0
    %963 = vmatpush1.msra.mxu0 0.0
    %964 = vmatprep.subr.mxu0 0.0
    %965 = vmatpush1.msra.mxu0 0.0
    %966 = vmatprep.subr.mxu0 0.0
    %967 = vmatpush1.msra.mxu0 0.0
    %968 = vmatprep.subr.mxu0 0.0
    %969 = vmatpush1.msra.mxu0 0.0
    %970 = vmatprep.subr.mxu0 0.0
    %971 = vmatpush1.msra.mxu0 0.0
    %972 = vmatprep.subr.mxu0 0.0
    %973 = vmatpush1.msra.mxu0 0.0
    %974 = vmatprep.subr.mxu0 0.0
    %975 = vmatpush1.msra.mxu0 0.0
    %976 = vmatprep.mubr.f32.mxu0 0.0
    %977 = vmatmul.mubr.f32.gmra.mrb[0].mxu0 %v909
    %v978 = vpop.f32.mrb[0].mxu0
    %v979 = vadd.f32 0.0, %v978
    %v980 = vpop.f32.mrb[0].mxu0
    %981 = vdwg.mxu0
    %v982 = vadd.f32 %v911, %v979
    %v983 = vtanh.pop %v982
    %s984 = scalar_lea.vmem [#allocation2], 56
    %v985 = vld [vmem:[%s984] sm:$0xff]
    %986 = vmatprep.subr.mxu0 0.0
    %987 = vmatpush1.msra.mxu0 %v434
    %988 = vmatprep.subr.mxu0 0.0
    %989 = vmatpush1.msra.mxu0 %v435
    %990 = vmatprep.subr.mxu0 0.0
    %991 = vmatpush1.msra.mxu0 %v436
    %992 = vmatprep.subr.mxu0 0.0
    %993 = vmatpush1.msra.mxu0 %v437
    %994 = vmatprep.subr.mxu0 0.0
    %995 = vmatpush1.msra.mxu0 %v438
    %996 = vmatprep.subr.mxu0 0.0
    %997 = vmatpush1.msra.mxu0 %v439
    %998 = vmatprep.subr.mxu0 0.0
    %999 = vmatpush1.msra.mxu0 %v440
    %1000 = vmatprep.subr.mxu0 0.0
    %1001 = vmatpush1.msra.mxu0 %v441
    %1002 = vmatprep.subr.mxu0 0.0
    %1003 = vmatpush1.msra.mxu0 %v442
    %1004 = vmatprep.subr.mxu0 0.0
    %1005 = vmatpush1.msra.mxu0 %v443
    %1006 = vmatprep.subr.mxu0 0.0
    %1007 = vmatpush1.msra.mxu0 %v444
    %1008 = vmatprep.subr.mxu0 0.0
    %1009 = vmatpush1.msra.mxu0 %v445
    %1010 = vmatprep.subr.mxu0 0.0
    %1011 = vmatpush1.msra.mxu0 %v446
    %1012 = vmatprep.subr.mxu0 0.0
    %1013 = vmatpush1.msra.mxu0 %v447
    %1014 = vmatprep.subr.mxu0 0.0
    %1015 = vmatpush1.msra.mxu0 %v448
    %1016 = vmatprep.subr.mxu0 0.0
    %1017 = vmatpush1.msra.mxu0 %v449
    %1018 = vmatprep.subr.mxu0 0.0
    %1019 = vmatpush1.msra.mxu0 0.0
    %1020 = vmatprep.subr.mxu0 0.0
    %1021 = vmatpush1.msra.mxu0 0.0
    %1022 = vmatprep.subr.mxu0 0.0
    %1023 = vmatpush1.msra.mxu0 0.0
    %1024 = vmatprep.subr.mxu0 0.0
    %1025 = vmatpush1.msra.mxu0 0.0
    %1026 = vmatprep.subr.mxu0 0.0
    %1027 = vmatpush1.msra.mxu0 0.0
    %1028 = vmatprep.subr.mxu0 0.0
    %1029 = vmatpush1.msra.mxu0 0.0
    %1030 = vmatprep.subr.mxu0 0.0
    %1031 = vmatpush1.msra.mxu0 0.0
    %1032 = vmatprep.subr.mxu0 0.0
    %1033 = vmatpush1.msra.mxu0 0.0
    %1034 = vmatprep.subr.mxu0 0.0
    %1035 = vmatpush1.msra.mxu0 0.0
    %1036 = vmatprep.subr.mxu0 0.0
    %1037 = vmatpush1.msra.mxu0 0.0
    %1038 = vmatprep.subr.mxu0 0.0
    %1039 = vmatpush1.msra.mxu0 0.0
    %1040 = vmatprep.subr.mxu0 0.0
    %1041 = vmatpush1.msra.mxu0 0.0
    %1042 = vmatprep.subr.mxu0 0.0
    %1043 = vmatpush1.msra.mxu0 0.0
    %1044 = vmatprep.subr.mxu0 0.0
    %1045 = vmatpush1.msra.mxu0 0.0
    %1046 = vmatprep.subr.mxu0 0.0
    %1047 = vmatpush1.msra.mxu0 0.0
    %1048 = vmatprep.subr.mxu0 0.0
    %1049 = vmatpush1.msra.mxu0 0.0
    %1050 = vmatprep.mubr.f32.mxu0 0.0
    %1051 = vmatmul.mubr.f32.gmra.mrb[0].mxu0 %v983
    %v1052 = vpop.f32.mrb[0].mxu0
    %v1053 = vadd.f32 0.0, %v1052
    %v1054 = vpop.f32.mrb[0].mxu0
    %1055 = vdwg.mxu0
    %v1056 = vadd.f32 %v985, %v1053
    %v1057 = vtanh.pop %v1056
    %v1058 = vld [vmem:[#allocation3] sm:$0xff]
    %1059 = vmatprep.subr.mxu0 0.0
    %1060 = vmatpush1.msra.mxu0 %v450
    %1061 = vmatprep.subr.mxu0 0.0
    %1062 = vmatpush1.msra.mxu0 %v451
    %1063 = vmatprep.subr.mxu0 0.0
    %1064 = vmatpush1.msra.mxu0 %v452
    %1065 = vmatprep.subr.mxu0 0.0
    %1066 = vmatpush1.msra.mxu0 %v453
    %1067 = vmatprep.subr.mxu0 0.0
    %1068 = vmatpush1.msra.mxu0 %v454
    %1069 = vmatprep.subr.mxu0 0.0
    %1070 = vmatpush1.msra.mxu0 %v455
    %1071 = vmatprep.subr.mxu0 0.0
    %1072 = vmatpush1.msra.mxu0 %v456
    %1073 = vmatprep.subr.mxu0 0.0
    %1074 = vmatpush1.msra.mxu0 %v457
    %1075 = vmatprep.subr.mxu0 0.0
    %1076 = vmatpush1.msra.mxu0 %v458
    %1077 = vmatprep.subr.mxu0 0.0
    %1078 = vmatpush1.msra.mxu0 %v459
    %1079 = vmatprep.subr.mxu0 0.0
    %1080 = vmatpush1.msra.mxu0 %v460
    %1081 = vmatprep.subr.mxu0 0.0
    %1082 = vmatpush1.msra.mxu0 %v461
    %1083 = vmatprep.subr.mxu0 0.0
    %1084 = vmatpush1.msra.mxu0 %v462
    %1085 = vmatprep.subr.mxu0 0.0
    %1086 = vmatpush1.msra.mxu0 %v463
    %1087 = vmatprep.subr.mxu0 0.0
    %1088 = vmatpush1.msra.mxu0 %v464
    %1089 = vmatprep.subr.mxu0 0.0
    %1090 = vmatpush1.msra.mxu0 %v465
    %1091 = vmatprep.subr.mxu0 0.0
    %1092 = vmatpush1.msra.mxu0 0.0
    %1093 = vmatprep.subr.mxu0 0.0
    %1094 = vmatpush1.msra.mxu0 0.0
    %1095 = vmatprep.subr.mxu0 0.0
    %1096 = vmatpush1.msra.mxu0 0.0
    %1097 = vmatprep.subr.mxu0 0.0
    %1098 = vmatpush1.msra.mxu0 0.0
    %1099 = vmatprep.subr.mxu0 0.0
    %1100 = vmatpush1.msra.mxu0 0.0
    %1101 = vmatprep.subr.mxu0 0.0
    %1102 = vmatpush1.msra.mxu0 0.0
    %1103 = vmatprep.subr.mxu0 0.0
    %1104 = vmatpush1.msra.mxu0 0.0
    %1105 = vmatprep.subr.mxu0 0.0
    %1106 = vmatpush1.msra.mxu0 0.0
    %1107 = vmatprep.subr.mxu0 0.0
    %1108 = vmatpush1.msra.mxu0 0.0
    %1109 = vmatprep.subr.mxu0 0.0
    %1110 = vmatpush1.msra.mxu0 0.0
    %1111 = vmatprep.subr.mxu0 0.0
    %1112 = vmatpush1.msra.mxu0 0.0
    %1113 = vmatprep.subr.mxu0 0.0
    %1114 = vmatpush1.msra.mxu0 0.0
    %1115 = vmatprep.subr.mxu0 0.0
    %1116 = vmatpush1.msra.mxu0 0.0
    %1117 = vmatprep.subr.mxu0 0.0
    %1118 = vmatpush1.msra.mxu0 0.0
    %1119 = vmatprep.subr.mxu0 0.0
    %1120 = vmatpush1.msra.mxu0 0.0
    %1121 = vmatprep.subr.mxu0 0.0
    %1122 = vmatpush1.msra.mxu0 0.0
    %1123 = vmatprep.mubr.f32.mxu0 0.0
    %1124 = vmatmul.mubr.f32.gmra.mrb[0].mxu0 %v1057
    %v1125 = vpop.f32.mrb[0].mxu0
    %v1126 = vadd.f32 0.0, %v1125
    %v1127 = vpop.f32.mrb[0].mxu0
    %1128 = vdwg.mxu0
    %v1129 = vadd.f32 %v1058, %v1126
    %v1130 = vtanh.pop %v1129
    %1131 = vst [vmem:[#allocation4] sm:$0xff] %v1130
    %s1132 = scalar_lea.vmem [#allocation3], 8
    %v1133 = vld [vmem:[%s1132] sm:$0xff]
    %1134 = vmatprep.subr.mxu0 0.0
    %1135 = vmatpush1.msra.mxu0 %v450
    %1136 = vmatprep.subr.mxu0 0.0
    %1137 = vmatpush1.msra.mxu0 %v451
    %1138 = vmatprep.subr.mxu0 0.0
    %1139 = vmatpush1.msra.mxu0 %v452
    %1140 = vmatprep.subr.mxu0 0.0
    %1141 = vmatpush1.msra.mxu0 %v453
    %1142 = vmatprep.subr.mxu0 0.0
    %1143 = vmatpush1.msra.mxu0 %v454
    %1144 = vmatprep.subr.mxu0 0.0
    %1145 = vmatpush1.msra.mxu0 %v455
    %1146 = vmatprep.subr.mxu0 0.0
    %1147 = vmatpush1.msra.mxu0 %v456
    %1148 = vmatprep.subr.mxu0 0.0
    %1149 = vmatpush1.msra.mxu0 %v457
    %1150 = vmatprep.subr.mxu0 0.0
    %1151 = vmatpush1.msra.mxu0 %v458
    %1152 = vmatprep.subr.mxu0 0.0
    %1153 = vmatpush1.msra.mxu0 %v459
    %1154 = vmatprep.subr.mxu0 0.0
    %1155 = vmatpush1.msra.mxu0 %v460
    %1156 = vmatprep.subr.mxu0 0.0
    %1157 = vmatpush1.msra.mxu0 %v461
    %1158 = vmatprep.subr.mxu0 0.0
    %1159 = vmatpush1.msra.mxu0 %v462
    %1160 = vmatprep.subr.mxu0 0.0
    %1161 = vmatpush1.msra.mxu0 %v463
    %1162 = vmatprep.subr.mxu0 0.0
    %1163 = vmatpush1.msra.mxu0 %v464
    %1164 = vmatprep.subr.mxu0 0.0
    %1165 = vmatpush1.msra.mxu0 %v465
    %1166 = vmatprep.subr.mxu0 0.0
    %1167 = vmatpush1.msra.mxu0 0.0
    %1168 = vmatprep.subr.mxu0 0.0
    %1169 = vmatpush1.msra.mxu0 0.0
    %1170 = vmatprep.subr.mxu0 0.0
    %1171 = vmatpush1.msra.mxu0 0.0
    %1172 = vmatprep.subr.mxu0 0.0
    %1173 = vmatpush1.msra.mxu0 0.0
    %1174 = vmatprep.subr.mxu0 0.0
    %1175 = vmatpush1.msra.mxu0 0.0
    %1176 = vmatprep.subr.mxu0 0.0
    %1177 = vmatpush1.msra.mxu0 0.0
    %1178 = vmatprep.subr.mxu0 0.0
    %1179 = vmatpush1.msra.mxu0 0.0
    %1180 = vmatprep.subr.mxu0 0.0
    %1181 = vmatpush1.msra.mxu0 0.0
    %1182 = vmatprep.subr.mxu0 0.0
    %1183 = vmatpush1.msra.mxu0 0.0
    %1184 = vmatprep.subr.mxu0 0.0
    %1185 = vmatpush1.msra.mxu0 0.0
    %1186 = vmatprep.subr.mxu0 0.0
    %1187 = vmatpush1.msra.mxu0 0.0
    %1188 = vmatprep.subr.mxu0 0.0
    %1189 = vmatpush1.msra.mxu0 0.0
    %1190 = vmatprep.subr.mxu0 0.0
    %1191 = vmatpush1.msra.mxu0 0.0
    %1192 = vmatprep.subr.mxu0 0.0
    %1193 = vmatpush1.msra.mxu0 0.0
    %1194 = vmatprep.subr.mxu0 0.0
    %1195 = vmatpush1.msra.mxu0 0.0
    %1196 = vmatprep.subr.mxu0 0.0
    %1197 = vmatpush1.msra.mxu0 0.0
    %1198 = vmatprep.mubr.f32.mxu0 0.0
    %1199 = vmatmul.mubr.f32.gmra.mrb[0].mxu0 %v1130
    %v1200 = vpop.f32.mrb[0].mxu0
    %v1201 = vadd.f32 0.0, %v1200
    %v1202 = vpop.f32.mrb[0].mxu0
    %1203 = vdwg.mxu0
    %v1204 = vadd.f32 %v1133, %v1201
    %v1205 = vtanh.pop %v1204
    %s1206 = scalar_lea.vmem [#allocation4], 8
    %1207 = vst [vmem:[%s1206] sm:$0xff] %v1205
    %s1208 = scalar_lea.vmem [#allocation3], 16
    %v1209 = vld [vmem:[%s1208] sm:$0xff]
    %1210 = vmatprep.subr.mxu0 0.0
    %1211 = vmatpush1.msra.mxu0 %v450
    %1212 = vmatprep.subr.mxu0 0.0
    %1213 = vmatpush1.msra.mxu0 %v451
    %1214 = vmatprep.subr.mxu0 0.0
    %1215 = vmatpush1.msra.mxu0 %v452
    %1216 = vmatprep.subr.mxu0 0.0
    %1217 = vmatpush1.msra.mxu0 %v453
    %1218 = vmatprep.subr.mxu0 0.0
    %1219 = vmatpush1.msra.mxu0 %v454
    %1220 = vmatprep.subr.mxu0 0.0
    %1221 = vmatpush1.msra.mxu0 %v455
    %1222 = vmatprep.subr.mxu0 0.0
    %1223 = vmatpush1.msra.mxu0 %v456
    %1224 = vmatprep.subr.mxu0 0.0
    %1225 = vmatpush1.msra.mxu0 %v457
    %1226 = vmatprep.subr.mxu0 0.0
    %1227 = vmatpush1.msra.mxu0 %v458
    %1228 = vmatprep.subr.mxu0 0.0
    %1229 = vmatpush1.msra.mxu0 %v459
    %1230 = vmatprep.subr.mxu0 0.0
    %1231 = vmatpush1.msra.mxu0 %v460
    %1232 = vmatprep.subr.mxu0 0.0
    %1233 = vmatpush1.msra.mxu0 %v461
    %1234 = vmatprep.subr.mxu0 0.0
    %1235 = vmatpush1.msra.mxu0 %v462
    %1236 = vmatprep.subr.mxu0 0.0
    %1237 = vmatpush1.msra.mxu0 %v463
    %1238 = vmatprep.subr.mxu0 0.0
    %1239 = vmatpush1.msra.mxu0 %v464
    %1240 = vmatprep.subr.mxu0 0.0
    %1241 = vmatpush1.msra.mxu0 %v465
    %1242 = vmatprep.subr.mxu0 0.0
    %1243 = vmatpush1.msra.mxu0 0.0
    %1244 = vmatprep.subr.mxu0 0.0
    %1245 = vmatpush1.msra.mxu0 0.0
    %1246 = vmatprep.subr.mxu0 0.0
    %1247 = vmatpush1.msra.mxu0 0.0
    %1248 = vmatprep.subr.mxu0 0.0
    %1249 = vmatpush1.msra.mxu0 0.0
    %1250 = vmatprep.subr.mxu0 0.0
    %1251 = vmatpush1.msra.mxu0 0.0
    %1252 = vmatprep.subr.mxu0 0.0
    %1253 = vmatpush1.msra.mxu0 0.0
    %1254 = vmatprep.subr.mxu0 0.0
    %1255 = vmatpush1.msra.mxu0 0.0
    %1256 = vmatprep.subr.mxu0 0.0
    %1257 = vmatpush1.msra.mxu0 0.0
    %1258 = vmatprep.subr.mxu0 0.0
    %1259 = vmatpush1.msra.mxu0 0.0
    %1260 = vmatprep.subr.mxu0 0.0
    %1261 = vmatpush1.msra.mxu0 0.0
    %1262 = vmatprep.subr.mxu0 0.0
    %1263 = vmatpush1.msra.mxu0 0.0
    %1264 = vmatprep.subr.mxu0 0.0
    %1265 = vmatpush1.msra.mxu0 0.0
    %1266 = vmatprep.subr.mxu0 0.0
    %1267 = vmatpush1.msra.mxu0 0.0
    %1268 = vmatprep.subr.mxu0 0.0
    %1269 = vmatpush1.msra.mxu0 0.0
    %1270 = vmatprep.subr.mxu0 0.0
    %1271 = vmatpush1.msra.mxu0 0.0
    %1272 = vmatprep.subr.mxu0 0.0
    %1273 = vmatpush1.msra.mxu0 0.0
    %1274 = vmatprep.mubr.f32.mxu0 0.0
    %1275 = vmatmul.mubr.f32.gmra.mrb[0].mxu0 %v1205
    %v1276 = vpop.f32.mrb[0].mxu0
    %v1277 = vadd.f32 0.0, %v1276
    %v1278 = vpop.f32.mrb[0].mxu0
    %1279 = vdwg.mxu0
    %v1280 = vadd.f32 %v1209, %v1277
    %v1281 = vtanh.pop %v1280
    %s1282 = scalar_lea.vmem [#allocation4], 16
    %1283 = vst [vmem:[%s1282] sm:$0xff] %v1281
    %s1284 = scalar_lea.vmem [#allocation3], 24
    %v1285 = vld [vmem:[%s1284] sm:$0xff]
    %1286 = vmatprep.subr.mxu0 0.0
    %1287 = vmatpush1.msra.mxu0 %v450
    %1288 = vmatprep.subr.mxu0 0.0
    %1289 = vmatpush1.msra.mxu0 %v451
    %1290 = vmatprep.subr.mxu0 0.0
    %1291 = vmatpush1.msra.mxu0 %v452
    %1292 = vmatprep.subr.mxu0 0.0
    %1293 = vmatpush1.msra.mxu0 %v453
    %1294 = vmatprep.subr.mxu0 0.0
    %1295 = vmatpush1.msra.mxu0 %v454
    %1296 = vmatprep.subr.mxu0 0.0
    %1297 = vmatpush1.msra.mxu0 %v455
    %1298 = vmatprep.subr.mxu0 0.0
    %1299 = vmatpush1.msra.mxu0 %v456
    %1300 = vmatprep.subr.mxu0 0.0
    %1301 = vmatpush1.msra.mxu0 %v457
    %1302 = vmatprep.subr.mxu0 0.0
    %1303 = vmatpush1.msra.mxu0 %v458
    %1304 = vmatprep.subr.mxu0 0.0
    %1305 = vmatpush1.msra.mxu0 %v459
    %1306 = vmatprep.subr.mxu0 0.0
    %1307 = vmatpush1.msra.mxu0 %v460
    %1308 = vmatprep.subr.mxu0 0.0
    %1309 = vmatpush1.msra.mxu0 %v461
    %1310 = vmatprep.subr.mxu0 0.0
    %1311 = vmatpush1.msra.mxu0 %v462
    %1312 = vmatprep.subr.mxu0 0.0
    %1313 = vmatpush1.msra.mxu0 %v463
    %1314 = vmatprep.subr.mxu0 0.0
    %1315 = vmatpush1.msra.mxu0 %v464
    %1316 = vmatprep.subr.mxu0 0.0
    %1317 = vmatpush1.msra.mxu0 %v465
    %1318 = vmatprep.subr.mxu0 0.0
    %1319 = vmatpush1.msra.mxu0 0.0
    %1320 = vmatprep.subr.mxu0 0.0
    %1321 = vmatpush1.msra.mxu0 0.0
    %1322 = vmatprep.subr.mxu0 0.0
    %1323 = vmatpush1.msra.mxu0 0.0
    %1324 = vmatprep.subr.mxu0 0.0
    %1325 = vmatpush1.msra.mxu0 0.0
    %1326 = vmatprep.subr.mxu0 0.0
    %1327 = vmatpush1.msra.mxu0 0.0
    %1328 = vmatprep.subr.mxu0 0.0
    %1329 = vmatpush1.msra.mxu0 0.0
    %1330 = vmatprep.subr.mxu0 0.0
    %1331 = vmatpush1.msra.mxu0 0.0
    %1332 = vmatprep.subr.mxu0 0.0
    %1333 = vmatpush1.msra.mxu0 0.0
    %1334 = vmatprep.subr.mxu0 0.0
    %1335 = vmatpush1.msra.mxu0 0.0
    %1336 = vmatprep.subr.mxu0 0.0
    %1337 = vmatpush1.msra.mxu0 0.0
    %1338 = vmatprep.subr.mxu0 0.0
    %1339 = vmatpush1.msra.mxu0 0.0
    %1340 = vmatprep.subr.mxu0 0.0
    %1341 = vmatpush1.msra.mxu0 0.0
    %1342 = vmatprep.subr.mxu0 0.0
    %1343 = vmatpush1.msra.mxu0 0.0
    %1344 = vmatprep.subr.mxu0 0.0
    %1345 = vmatpush1.msra.mxu0 0.0
    %1346 = vmatprep.subr.mxu0 0.0
    %1347 = vmatpush1.msra.mxu0 0.0
    %1348 = vmatprep.subr.mxu0 0.0
    %1349 = vmatpush1.msra.mxu0 0.0
    %1350 = vmatprep.mubr.f32.mxu0 0.0
    %1351 = vmatmul.mubr.f32.gmra.mrb[0].mxu0 %v1281
    %v1352 = vpop.f32.mrb[0].mxu0
    %v1353 = vadd.f32 0.0, %v1352
    %v1354 = vpop.f32.mrb[0].mxu0
    %1355 = vdwg.mxu0
    %v1356 = vadd.f32 %v1285, %v1353
    %v1357 = vtanh.pop %v1356
    %s1358 = scalar_lea.vmem [#allocation4], 24
    %1359 = vst [vmem:[%s1358] sm:$0xff] %v1357
    %s1360 = scalar_lea.vmem [#allocation3], 32
    %v1361 = vld [vmem:[%s1360] sm:$0xff]
    %1362 = vmatprep.subr.mxu0 0.0
    %1363 = vmatpush1.msra.mxu0 %v450
    %1364 = vmatprep.subr.mxu0 0.0
    %1365 = vmatpush1.msra.mxu0 %v451
    %1366 = vmatprep.subr.mxu0 0.0
    %1367 = vmatpush1.msra.mxu0 %v452
    %1368 = vmatprep.subr.mxu0 0.0
    %1369 = vmatpush1.msra.mxu0 %v453
    %1370 = vmatprep.subr.mxu0 0.0
    %1371 = vmatpush1.msra.mxu0 %v454
    %1372 = vmatprep.subr.mxu0 0.0
    %1373 = vmatpush1.msra.mxu0 %v455
    %1374 = vmatprep.subr.mxu0 0.0
    %1375 = vmatpush1.msra.mxu0 %v456
    %1376 = vmatprep.subr.mxu0 0.0
    %1377 = vmatpush1.msra.mxu0 %v457
    %1378 = vmatprep.subr.mxu0 0.0
    %1379 = vmatpush1.msra.mxu0 %v458
    %1380 = vmatprep.subr.mxu0 0.0
    %1381 = vmatpush1.msra.mxu0 %v459
    %1382 = vmatprep.subr.mxu0 0.0
    %1383 = vmatpush1.msra.mxu0 %v460
    %1384 = vmatprep.subr.mxu0 0.0
    %1385 = vmatpush1.msra.mxu0 %v461
    %1386 = vmatprep.subr.mxu0 0.0
    %1387 = vmatpush1.msra.mxu0 %v462
    %1388 = vmatprep.subr.mxu0 0.0
    %1389 = vmatpush1.msra.mxu0 %v463
    %1390 = vmatprep.subr.mxu0 0.0
    %1391 = vmatpush1.msra.mxu0 %v464
    %1392 = vmatprep.subr.mxu0 0.0
    %1393 = vmatpush1.msra.mxu0 %v465
    %1394 = vmatprep.subr.mxu0 0.0
    %1395 = vmatpush1.msra.mxu0 0.0
    %1396 = vmatprep.subr.mxu0 0.0
    %1397 = vmatpush1.msra.mxu0 0.0
    %1398 = vmatprep.subr.mxu0 0.0
    %1399 = vmatpush1.msra.mxu0 0.0
    %1400 = vmatprep.subr.mxu0 0.0
    %1401 = vmatpush1.msra.mxu0 0.0
    %1402 = vmatprep.subr.mxu0 0.0
    %1403 = vmatpush1.msra.mxu0 0.0
    %1404 = vmatprep.subr.mxu0 0.0
    %1405 = vmatpush1.msra.mxu0 0.0
    %1406 = vmatprep.subr.mxu0 0.0
    %1407 = vmatpush1.msra.mxu0 0.0
    %1408 = vmatprep.subr.mxu0 0.0
    %1409 = vmatpush1.msra.mxu0 0.0
    %1410 = vmatprep.subr.mxu0 0.0
    %1411 = vmatpush1.msra.mxu0 0.0
    %1412 = vmatprep.subr.mxu0 0.0
    %1413 = vmatpush1.msra.mxu0 0.0
    %1414 = vmatprep.subr.mxu0 0.0
    %1415 = vmatpush1.msra.mxu0 0.0
    %1416 = vmatprep.subr.mxu0 0.0
    %1417 = vmatpush1.msra.mxu0 0.0
    %1418 = vmatprep.subr.mxu0 0.0
    %1419 = vmatpush1.msra.mxu0 0.0
    %1420 = vmatprep.subr.mxu0 0.0
    %1421 = vmatpush1.msra.mxu0 0.0
    %1422 = vmatprep.subr.mxu0 0.0
    %1423 = vmatpush1.msra.mxu0 0.0
    %1424 = vmatprep.subr.mxu0 0.0
    %1425 = vmatpush1.msra.mxu0 0.0
    %1426 = vmatprep.mubr.f32.mxu0 0.0
    %1427 = vmatmul.mubr.f32.gmra.mrb[0].mxu0 %v1357
    %v1428 = vpop.f32.mrb[0].mxu0
    %v1429 = vadd.f32 0.0, %v1428
    %v1430 = vpop.f32.mrb[0].mxu0
    %1431 = vdwg.mxu0
    %v1432 = vadd.f32 %v1361, %v1429
    %v1433 = vtanh.pop %v1432
    %s1434 = scalar_lea.vmem [#allocation4], 32
    %1435 = vst [vmem:[%s1434] sm:$0xff] %v1433
    %s1436 = scalar_lea.vmem [#allocation3], 40
    %v1437 = vld [vmem:[%s1436] sm:$0xff]
    %1438 = vmatprep.subr.mxu0 0.0
    %1439 = vmatpush1.msra.mxu0 %v450
    %1440 = vmatprep.subr.mxu0 0.0
    %1441 = vmatpush1.msra.mxu0 %v451
    %1442 = vmatprep.subr.mxu0 0.0
    %1443 = vmatpush1.msra.mxu0 %v452
    %1444 = vmatprep.subr.mxu0 0.0
    %1445 = vmatpush1.msra.mxu0 %v453
    %1446 = vmatprep.subr.mxu0 0.0
    %1447 = vmatpush1.msra.mxu0 %v454
    %1448 = vmatprep.subr.mxu0 0.0
    %1449 = vmatpush1.msra.mxu0 %v455
    %1450 = vmatprep.subr.mxu0 0.0
    %1451 = vmatpush1.msra.mxu0 %v456
    %1452 = vmatprep.subr.mxu0 0.0
    %1453 = vmatpush1.msra.mxu0 %v457
    %1454 = vmatprep.subr.mxu0 0.0
    %1455 = vmatpush1.msra.mxu0 %v458
    %1456 = vmatprep.subr.mxu0 0.0
    %1457 = vmatpush1.msra.mxu0 %v459
    %1458 = vmatprep.subr.mxu0 0.0
    %1459 = vmatpush1.msra.mxu0 %v460
    %1460 = vmatprep.subr.mxu0 0.0
    %1461 = vmatpush1.msra.mxu0 %v461
    %1462 = vmatprep.subr.mxu0 0.0
    %1463 = vmatpush1.msra.mxu0 %v462
    %1464 = vmatprep.subr.mxu0 0.0
    %1465 = vmatpush1.msra.mxu0 %v463
    %1466 = vmatprep.subr.mxu0 0.0
    %1467 = vmatpush1.msra.mxu0 %v464
    %1468 = vmatprep.subr.mxu0 0.0
    %1469 = vmatpush1.msra.mxu0 %v465
    %1470 = vmatprep.subr.mxu0 0.0
    %1471 = vmatpush1.msra.mxu0 0.0
    %1472 = vmatprep.subr.mxu0 0.0
    %1473 = vmatpush1.msra.mxu0 0.0
    %1474 = vmatprep.subr.mxu0 0.0
    %1475 = vmatpush1.msra.mxu0 0.0
    %1476 = vmatprep.subr.mxu0 0.0
    %1477 = vmatpush1.msra.mxu0 0.0
    %1478 = vmatprep.subr.mxu0 0.0
    %1479 = vmatpush1.msra.mxu0 0.0
    %1480 = vmatprep.subr.mxu0 0.0
    %1481 = vmatpush1.msra.mxu0 0.0
    %1482 = vmatprep.subr.mxu0 0.0
    %1483 = vmatpush1.msra.mxu0 0.0
    %1484 = vmatprep.subr.mxu0 0.0
    %1485 = vmatpush1.msra.mxu0 0.0
    %1486 = vmatprep.subr.mxu0 0.0
    %1487 = vmatpush1.msra.mxu0 0.0
    %1488 = vmatprep.subr.mxu0 0.0
    %1489 = vmatpush1.msra.mxu0 0.0
    %1490 = vmatprep.subr.mxu0 0.0
    %1491 = vmatpush1.msra.mxu0 0.0
    %1492 = vmatprep.subr.mxu0 0.0
    %1493 = vmatpush1.msra.mxu0 0.0
    %1494 = vmatprep.subr.mxu0 0.0
    %1495 = vmatpush1.msra.mxu0 0.0
    %1496 = vmatprep.subr.mxu0 0.0
    %1497 = vmatpush1.msra.mxu0 0.0
    %1498 = vmatprep.subr.mxu0 0.0
    %1499 = vmatpush1.msra.mxu0 0.0
    %1500 = vmatprep.subr.mxu0 0.0
    %1501 = vmatpush1.msra.mxu0 0.0
    %1502 = vmatprep.mubr.f32.mxu0 0.0
    %1503 = vmatmul.mubr.f32.gmra.mrb[0].mxu0 %v1433
    %v1504 = vpop.f32.mrb[0].mxu0
    %v1505 = vadd.f32 0.0, %v1504
    %v1506 = vpop.f32.mrb[0].mxu0
    %1507 = vdwg.mxu0
    %v1508 = vadd.f32 %v1437, %v1505
    %v1509 = vtanh.pop %v1508
    %s1510 = scalar_lea.vmem [#allocation4], 40
    %1511 = vst [vmem:[%s1510] sm:$0xff] %v1509
    %s1512 = scalar_lea.vmem [#allocation3], 48
    %v1513 = vld [vmem:[%s1512] sm:$0xff]
    %1514 = vmatprep.subr.mxu0 0.0
    %1515 = vmatpush1.msra.mxu0 %v450
    %1516 = vmatprep.subr.mxu0 0.0
    %1517 = vmatpush1.msra.mxu0 %v451
    %1518 = vmatprep.subr.mxu0 0.0
    %1519 = vmatpush1.msra.mxu0 %v452
    %1520 = vmatprep.subr.mxu0 0.0
    %1521 = vmatpush1.msra.mxu0 %v453
    %1522 = vmatprep.subr.mxu0 0.0
    %1523 = vmatpush1.msra.mxu0 %v454
    %1524 = vmatprep.subr.mxu0 0.0
    %1525 = vmatpush1.msra.mxu0 %v455
    %1526 = vmatprep.subr.mxu0 0.0
    %1527 = vmatpush1.msra.mxu0 %v456
    %1528 = vmatprep.subr.mxu0 0.0
    %1529 = vmatpush1.msra.mxu0 %v457
    %1530 = vmatprep.subr.mxu0 0.0
    %1531 = vmatpush1.msra.mxu0 %v458
    %1532 = vmatprep.subr.mxu0 0.0
    %1533 = vmatpush1.msra.mxu0 %v459
    %1534 = vmatprep.subr.mxu0 0.0
    %1535 = vmatpush1.msra.mxu0 %v460
    %1536 = vmatprep.subr.mxu0 0.0
    %1537 = vmatpush1.msra.mxu0 %v461
    %1538 = vmatprep.subr.mxu0 0.0
    %1539 = vmatpush1.msra.mxu0 %v462
    %1540 = vmatprep.subr.mxu0 0.0
    %1541 = vmatpush1.msra.mxu0 %v463
    %1542 = vmatprep.subr.mxu0 0.0
    %1543 = vmatpush1.msra.mxu0 %v464
    %1544 = vmatprep.subr.mxu0 0.0
    %1545 = vmatpush1.msra.mxu0 %v465
    %1546 = vmatprep.subr.mxu0 0.0
    %1547 = vmatpush1.msra.mxu0 0.0
    %1548 = vmatprep.subr.mxu0 0.0
    %1549 = vmatpush1.msra.mxu0 0.0
    %1550 = vmatprep.subr.mxu0 0.0
    %1551 = vmatpush1.msra.mxu0 0.0
    %1552 = vmatprep.subr.mxu0 0.0
    %1553 = vmatpush1.msra.mxu0 0.0
    %1554 = vmatprep.subr.mxu0 0.0
    %1555 = vmatpush1.msra.mxu0 0.0
    %1556 = vmatprep.subr.mxu0 0.0
    %1557 = vmatpush1.msra.mxu0 0.0
    %1558 = vmatprep.subr.mxu0 0.0
    %1559 = vmatpush1.msra.mxu0 0.0
    %1560 = vmatprep.subr.mxu0 0.0
    %1561 = vmatpush1.msra.mxu0 0.0
    %1562 = vmatprep.subr.mxu0 0.0
    %1563 = vmatpush1.msra.mxu0 0.0
    %1564 = vmatprep.subr.mxu0 0.0
    %1565 = vmatpush1.msra.mxu0 0.0
    %1566 = vmatprep.subr.mxu0 0.0
    %1567 = vmatpush1.msra.mxu0 0.0
    %1568 = vmatprep.subr.mxu0 0.0
    %1569 = vmatpush1.msra.mxu0 0.0
    %1570 = vmatprep.subr.mxu0 0.0
    %1571 = vmatpush1.msra.mxu0 0.0
    %1572 = vmatprep.subr.mxu0 0.0
    %1573 = vmatpush1.msra.mxu0 0.0
    %1574 = vmatprep.subr.mxu0 0.0
    %1575 = vmatpush1.msra.mxu0 0.0
    %1576 = vmatprep.subr.mxu0 0.0
    %1577 = vmatpush1.msra.mxu0 0.0
    %1578 = vmatprep.mubr.f32.mxu0 0.0
    %1579 = vmatmul.mubr.f32.gmra.mrb[0].mxu0 %v1509
    %v1580 = vpop.f32.mrb[0].mxu0
    %v1581 = vadd.f32 0.0, %v1580
    %v1582 = vpop.f32.mrb[0].mxu0
    %1583 = vdwg.mxu0
    %v1584 = vadd.f32 %v1513, %v1581
    %v1585 = vtanh.pop %v1584
    %s1586 = scalar_lea.vmem [#allocation4], 48
    %1587 = vst [vmem:[%s1586] sm:$0xff] %v1585
    %s1588 = scalar_lea.vmem [#allocation3], 56
    %v1589 = vld [vmem:[%s1588] sm:$0xff]
    %1590 = vmatprep.subr.mxu0 0.0
    %1591 = vmatpush1.msra.mxu0 %v450
    %1592 = vmatprep.subr.mxu0 0.0
    %1593 = vmatpush1.msra.mxu0 %v451
    %1594 = vmatprep.subr.mxu0 0.0
    %1595 = vmatpush1.msra.mxu0 %v452
    %1596 = vmatprep.subr.mxu0 0.0
    %1597 = vmatpush1.msra.mxu0 %v453
    %1598 = vmatprep.subr.mxu0 0.0
    %1599 = vmatpush1.msra.mxu0 %v454
    %1600 = vmatprep.subr.mxu0 0.0
    %1601 = vmatpush1.msra.mxu0 %v455
    %1602 = vmatprep.subr.mxu0 0.0
    %1603 = vmatpush1.msra.mxu0 %v456
    %1604 = vmatprep.subr.mxu0 0.0
    %1605 = vmatpush1.msra.mxu0 %v457
    %1606 = vmatprep.subr.mxu0 0.0
    %1607 = vmatpush1.msra.mxu0 %v458
    %1608 = vmatprep.subr.mxu0 0.0
    %1609 = vmatpush1.msra.mxu0 %v459
    %1610 = vmatprep.subr.mxu0 0.0
    %1611 = vmatpush1.msra.mxu0 %v460
    %1612 = vmatprep.subr.mxu0 0.0
    %1613 = vmatpush1.msra.mxu0 %v461
    %1614 = vmatprep.subr.mxu0 0.0
    %1615 = vmatpush1.msra.mxu0 %v462
    %1616 = vmatprep.subr.mxu0 0.0
    %1617 = vmatpush1.msra.mxu0 %v463
    %1618 = vmatprep.subr.mxu0 0.0
    %1619 = vmatpush1.msra.mxu0 %v464
    %1620 = vmatprep.subr.mxu0 0.0
    %1621 = vmatpush1.msra.mxu0 %v465
    %1622 = vmatprep.subr.mxu0 0.0
    %1623 = vmatpush1.msra.mxu0 0.0
    %1624 = vmatprep.subr.mxu0 0.0
    %1625 = vmatpush1.msra.mxu0 0.0
    %1626 = vmatprep.subr.mxu0 0.0
    %1627 = vmatpush1.msra.mxu0 0.0
    %1628 = vmatprep.subr.mxu0 0.0
    %1629 = vmatpush1.msra.mxu0 0.0
    %1630 = vmatprep.subr.mxu0 0.0
    %1631 = vmatpush1.msra.mxu0 0.0
    %1632 = vmatprep.subr.mxu0 0.0
    %1633 = vmatpush1.msra.mxu0 0.0
    %1634 = vmatprep.subr.mxu0 0.0
    %1635 = vmatpush1.msra.mxu0 0.0
    %1636 = vmatprep.subr.mxu0 0.0
    %1637 = vmatpush1.msra.mxu0 0.0
    %1638 = vmatprep.subr.mxu0 0.0
    %1639 = vmatpush1.msra.mxu0 0.0
    %1640 = vmatprep.subr.mxu0 0.0
    %1641 = vmatpush1.msra.mxu0 0.0
    %1642 = vmatprep.subr.mxu0 0.0
    %1643 = vmatpush1.msra.mxu0 0.0
    %1644 = vmatprep.subr.mxu0 0.0
    %1645 = vmatpush1.msra.mxu0 0.0
    %1646 = vmatprep.subr.mxu0 0.0
    %1647 = vmatpush1.msra.mxu0 0.0
    %1648 = vmatprep.subr.mxu0 0.0
    %1649 = vmatpush1.msra.mxu0 0.0
    %1650 = vmatprep.subr.mxu0 0.0
    %1651 = vmatpush1.msra.mxu0 0.0
    %1652 = vmatprep.subr.mxu0 0.0
    %1653 = vmatpush1.msra.mxu0 0.0
    %1654 = vmatprep.mubr.f32.mxu0 0.0
    %1655 = vmatmul.mubr.f32.gmra.mrb[0].mxu0 %v1585
    %v1656 = vpop.f32.mrb[0].mxu0
    %v1657 = vadd.f32 0.0, %v1656
    %v1658 = vpop.f32.mrb[0].mxu0
    %1659 = vdwg.mxu0
    %v1660 = vadd.f32 %v1589, %v1657
    %v1661 = vtanh.pop %v1660
    %s1662 = scalar_lea.vmem [#allocation4], 56
    %1663 = vst [vmem:[%s1662] sm:$0xff] %v1661
    %v1664 = vld [vmem:[#allocation4] sm:$0xff]
    %v1665 = vld [vmem:[#allocation4 + $0x8] sm:$0xff]
    %v1666 = vld [vmem:[#allocation4 + $0x10] sm:$0xff]
    %v1667 = vld [vmem:[#allocation4 + $0x18] sm:$0xff]
    %v1668 = vld [vmem:[#allocation4 + $0x20] sm:$0xff]
    %v1669 = vld [vmem:[#allocation4 + $0x28] sm:$0xff]
    %v1670 = vld [vmem:[#allocation4 + $0x30] sm:$0xff]
    %v1671 = vld [vmem:[#allocation4 + $0x38] sm:$0xff]
    %v1672 = vld [vmem:[#allocation17] sm:$0xff]
    %v1673 = vld [vmem:[#allocation17 + $0x8] sm:$0xff]
    %v1674 = vld [vmem:[#allocation17 + $0x10] sm:$0xff]
    %v1675 = vld [vmem:[#allocation17 + $0x18] sm:$0xff]
    %v1676 = vld [vmem:[#allocation17 + $0x20] sm:$0xff]
    %v1677 = vld [vmem:[#allocation17 + $0x28] sm:$0xff]
    %v1678 = vld [vmem:[#allocation17 + $0x30] sm:$0xff]
    %v1679 = vld [vmem:[#allocation17 + $0x38] sm:$0xff]
    %v1680 = vld [vmem:[#allocation17 + $0x40] sm:$0xff]
    %v1681 = vld [vmem:[#allocation17 + $0x48] sm:$0xff]
    %v1682 = vld [vmem:[#allocation17 + $0x50] sm:$0xff]
    %v1683 = vld [vmem:[#allocation17 + $0x58] sm:$0xff]
    %v1684 = vld [vmem:[#allocation17 + $0x60] sm:$0xff]
    %v1685 = vld [vmem:[#allocation17 + $0x68] sm:$0xff]
    %v1686 = vld [vmem:[#allocation17 + $0x70] sm:$0xff]
    %v1687 = vld [vmem:[#allocation17 + $0x78] sm:$0xff]
    %v1688 = vld [vmem:[%s10] sm:$0x1]
    %v1690 = vlaneseq
    %v1691 = vshrl.u32 %v1690, 7
    %v1692 = vsub.s32 0, %v1691
    %v1693 = vrot.slane %v1688, %v1692
    %1695 = vmatprep.subr.mxu0 0.0
    %1696 = vmatpush1.msra.mxu0 %v1672
    %1697 = vmatprep.subr.mxu0 0.0
    %1698 = vmatpush1.msra.mxu0 %v1673
    %1699 = vmatprep.subr.mxu0 0.0
    %1700 = vmatpush1.msra.mxu0 %v1674
    %1701 = vmatprep.subr.mxu0 0.0
    %1702 = vmatpush1.msra.mxu0 %v1675
    %1703 = vmatprep.subr.mxu0 0.0
    %1704 = vmatpush1.msra.mxu0 %v1676
    %1705 = vmatprep.subr.mxu0 0.0
    %1706 = vmatpush1.msra.mxu0 %v1677
    %1707 = vmatprep.subr.mxu0 0.0
    %1708 = vmatpush1.msra.mxu0 %v1678
    %1709 = vmatprep.subr.mxu0 0.0
    %1710 = vmatpush1.msra.mxu0 %v1679
    %1711 = vmatprep.subr.mxu0 0.0
    %1712 = vmatpush1.msra.mxu0 %v1680
    %1713 = vmatprep.subr.mxu0 0.0
    %1714 = vmatpush1.msra.mxu0 %v1681
    %1715 = vmatprep.subr.mxu0 0.0
    %1716 = vmatpush1.msra.mxu0 %v1682
    %1717 = vmatprep.subr.mxu0 0.0
    %1718 = vmatpush1.msra.mxu0 %v1683
    %1719 = vmatprep.subr.mxu0 0.0
    %1720 = vmatpush1.msra.mxu0 %v1684
    %1721 = vmatprep.subr.mxu0 0.0
    %1722 = vmatpush1.msra.mxu0 %v1685
    %1723 = vmatprep.subr.mxu0 0.0
    %1724 = vmatpush1.msra.mxu0 %v1686
    %1725 = vmatprep.subr.mxu0 0.0
    %1726 = vmatpush1.msra.mxu0 %v1687
    %1727 = vmatprep.subr.mxu0 0.0
    %1728 = vmatpush1.msra.mxu0 0.0
    %1729 = vmatprep.subr.mxu0 0.0
    %1730 = vmatpush1.msra.mxu0 0.0
    %1731 = vmatprep.subr.mxu0 0.0
    %1732 = vmatpush1.msra.mxu0 0.0
    %1733 = vmatprep.subr.mxu0 0.0
    %1734 = vmatpush1.msra.mxu0 0.0
    %1735 = vmatprep.subr.mxu0 0.0
    %1736 = vmatpush1.msra.mxu0 0.0
    %1737 = vmatprep.subr.mxu0 0.0
    %1738 = vmatpush1.msra.mxu0 0.0
    %1739 = vmatprep.subr.mxu0 0.0
    %1740 = vmatpush1.msra.mxu0 0.0
    %1741 = vmatprep.subr.mxu0 0.0
    %1742 = vmatpush1.msra.mxu0 0.0
    %1743 = vmatprep.subr.mxu0 0.0
    %1744 = vmatpush1.msra.mxu0 0.0
    %1745 = vmatprep.subr.mxu0 0.0
    %1746 = vmatpush1.msra.mxu0 0.0
    %1747 = vmatprep.subr.mxu0 0.0
    %1748 = vmatpush1.msra.mxu0 0.0
    %1749 = vmatprep.subr.mxu0 0.0
    %1750 = vmatpush1.msra.mxu0 0.0
    %1751 = vmatprep.subr.mxu0 0.0
    %1752 = vmatpush1.msra.mxu0 0.0
    %1753 = vmatprep.subr.mxu0 0.0
    %1754 = vmatpush1.msra.mxu0 0.0
    %1755 = vmatprep.subr.mxu0 0.0
    %1756 = vmatpush1.msra.mxu0 0.0
    %1757 = vmatprep.subr.mxu0 0.0
    %1758 = vmatpush1.msra.mxu0 0.0
    %1759 = vmatprep.mubr.f32.mxu0 0.0
    %1760 = vmatmul.mubr.f32.gmra.mrb[0].mxu0 %v1664
    %v1761 = vpop.f32.mrb[0].mxu0
    %v1762 = vadd.f32 %v1693, %v1761
    %v1763 = vpop.f32.mrb[0].mxu0
    %1764 = vmatprep.mubr.f32.mxu0 0.0
    %1765 = vmatmul.mubr.f32.gmra.mrb[0].mxu0 %v1665
    %v1766 = vpop.f32.mrb[0].mxu0
    %v1767 = vadd.f32 %v1693, %v1766
    %v1768 = vpop.f32.mrb[0].mxu0
    %1769 = vmatprep.mubr.f32.mxu0 0.0
    %1770 = vmatmul.mubr.f32.gmra.mrb[0].mxu0 %v1666
    %v1771 = vpop.f32.mrb[0].mxu0
    %v1772 = vadd.f32 %v1693, %v1771
    %v1773 = vpop.f32.mrb[0].mxu0
    %1774 = vmatprep.mubr.f32.mxu0 0.0
    %1775 = vmatmul.mubr.f32.gmra.mrb[0].mxu0 %v1667
    %v1776 = vpop.f32.mrb[0].mxu0
    %v1777 = vadd.f32 %v1693, %v1776
    %v1778 = vpop.f32.mrb[0].mxu0
    %1779 = vmatprep.mubr.f32.mxu0 0.0
    %1780 = vmatmul.mubr.f32.gmra.mrb[0].mxu0 %v1668
    %v1781 = vpop.f32.mrb[0].mxu0
    %v1782 = vadd.f32 %v1693, %v1781
    %v1783 = vpop.f32.mrb[0].mxu0
    %1784 = vmatprep.mubr.f32.mxu0 0.0
    %1785 = vmatmul.mubr.f32.gmra.mrb[0].mxu0 %v1669
    %v1786 = vpop.f32.mrb[0].mxu0
    %v1787 = vadd.f32 %v1693, %v1786
    %v1788 = vpop.f32.mrb[0].mxu0
    %1789 = vmatprep.mubr.f32.mxu0 0.0
    %1790 = vmatmul.mubr.f32.gmra.mrb[0].mxu0 %v1670
    %v1791 = vpop.f32.mrb[0].mxu0
    %v1792 = vadd.f32 %v1693, %v1791
    %v1793 = vpop.f32.mrb[0].mxu0
    %1794 = vmatprep.mubr.f32.mxu0 0.0
    %1795 = vmatmul.mubr.f32.gmra.mrb[0].mxu0 %v1671
    %v1796 = vpop.f32.mrb[0].mxu0
    %v1797 = vadd.f32 %v1693, %v1796
    %v1798 = vpop.f32.mrb[0].mxu0
    %1799 = vdwg.mxu0
    %1800 = vst [vmem:[#allocation19] sm:$0xff] %v1762
    %1801 = vst [vmem:[#allocation19 + $0x8] sm:$0xff] %v1767
    %1802 = vst [vmem:[#allocation19 + $0x10] sm:$0xff] %v1772
    %1803 = vst [vmem:[#allocation19 + $0x18] sm:$0xff] %v1777
    %1804 = vst [vmem:[#allocation19 + $0x20] sm:$0xff] %v1782
    %1805 = vst [vmem:[#allocation19 + $0x28] sm:$0xff] %v1787
    %1806 = vst [vmem:[#allocation19 + $0x30] sm:$0xff] %v1792
    %1807 = vst [vmem:[#allocation19 + $0x38] sm:$0xff] %v1797
    // Predicated region
    $region78: #{tpu_custom_call.1} parent=1 // pred_check
      _
    $region79: #{tpu_custom_call.1} parent=1 // pred_check_branch
      %1809 = sbr.rel (0) target = $region81
    $region80: #{tpu_custom_call.1} parent=1 // pred_region
      %s1811 = ssub.s32 1024, 1024
      %1812 = vsyncadd [#allocation7], %s1811
      %s1813 = sshll.u32 [#allocation19], 4
      %s1814 = int_to_ptr.vmem [resolvable:$true] %s1813
      %1819 = dma.vmem_to_hbm [thread:$0]  %s1814, 1024, %s11, [#allocation7], 128, 128, 8
    $region81: #{tpu_custom_call.1} parent=1 // pred_fallthru
      _
    // Predicated region
    $region82: #{tpu_custom_call.1} parent=1 // pred_check
      _
    $region83: #{tpu_custom_call.1} parent=1 // pred_check_branch
      %1821 = sbr.rel (0) target = $region85
    $region84: #{tpu_custom_call.1} parent=1 // pred_region
      %1822 = dma.done [#allocation7], 1024
    $region85: #{tpu_custom_call.1} parent=1 // pred_fallthru
      _
    %1823 = vsyncpa [#allocation6], 1
    %1824 = vsyncpa [#allocation9], 1
    %1825 = vsyncpa [#allocation12], 1
    %1826 = vsyncpa [#allocation15], 1
    %1827 = vsyncpa [#allocation18], 1
    %1828 = vsyncpa [#allocation7], 1

</llo_original>
